<compile_context>
chip_gen: v7x
topology: tpu7x:2x2x1
jax: 0.10.0
libtpu: 0.0.40
codegen_flags: <defaults>
</compile_context>

<pallas_src>
import math

import jax
import jax.numpy as jnp
from jax import lax
from jax.experimental import pallas as pl
from jax.experimental.pallas import tpu as pltpu

EPS = 1e-5
SUB = 8          # timesteps per unrolled sub-chunk (one sublane tile)


def _pick_dtile(din):
    # d_inner tile for the scan: keep h + dA + u under ~20 vregs.
    if din % 256 == 0:
        return 256
    if din % 128 == 0:
        return 128
    return din


def _softplus(x):
    # matches F.softplus(beta=1, threshold=20)
    return jnp.where(x > 20.0, x, jnp.log1p(jnp.exp(jnp.minimum(x, 20.0))))


def _silu(x):
    return x * jax.nn.sigmoid(x)


def _rms(x, w):
    return x * lax.rsqrt(jnp.mean(x * x, axis=-1, keepdims=True) + EPS) * w


def residual_mamba_block_kernel(
    x_ref, norm_w_ref, w_in_ref, conv_w_ref, conv_b_ref, w_dt_ref, w_bct_ref,
    dtln_w_ref, bln_w_ref, cln_w_ref, dtp_w_ref, dtp_b_ref, A_T_ref, D_ref,
    out_w_ref,
    o_ref,
    h_ref, cin_ref, xf_ref, z_ref, d_ref, y_ref, b_ref, c_ref,
):
    c_idx = pl.program_id(1)

    T = d_ref.shape[0]
    Din = D_ref.shape[1]
    Ds = A_T_ref.shape[0]
    K = conv_w_ref.shape[0]
    R = dtp_w_ref.shape[0]
    HP = cin_ref.shape[0] - T                       # halo pad rows (8-aligned)
    NSUB = b_ref.shape[0]
    DT = _pick_dtile(Din)

    # ---- per-sequence state init (first time chunk of each batch row) ----
    @pl.when(c_idx == 0)
    def _():
        h_ref[...] = jnp.zeros_like(h_ref)
        cin_ref[0:HP, :] = jnp.zeros((HP, Din), jnp.float32)

    # ---- ResidualBlock.norm + fused in_proj (bf16 in / f32 acc) ----
    xn = _rms(x_ref[0], norm_w_ref[...])            # (T, Dm)
    xz = jnp.dot(xn.astype(jnp.bfloat16), w_in_ref[...],
                 preferred_element_type=jnp.float32)            # (T, 2*Din)
    z_ref[...] = xz[:, Din:]                        # stage gate, reload later
    xf_raw = xz[:, :Din]

    # ---- causal depthwise conv1d (padding = K-1, truncate to T) ----
    # cin_ref rows [HP-(K-1), HP) hold the last K-1 inputs of the previous
    # chunk (zeros at chunk 0); rows [HP, HP+T) are the current chunk
    # (8-row-aligned bulk store).
    cin_ref[HP:HP + T, :] = xf_raw
    cw = conv_w_ref[...]                            # (K, Din)
    base_off = HP - (K - 1)
    acc = conv_b_ref[...] + cin_ref[base_off:base_off + T, :] * cw[0:1, :]
    for k in range(1, K):
        acc = acc + cin_ref[base_off + k:base_off + k + T, :] * cw[k:k + 1, :]
    # carry the halo (last K-1 raw inputs) to the next time chunk
    tail = cin_ref[HP + T - (K - 1):HP + T, :]
    cin_ref[HP - (K - 1):HP, :] = tail

    xf = _silu(acc)                                 # (T, Din)   dropout = id
    xf_ref[...] = xf                                # stage for scan / skip term
    xf16 = xf.astype(jnp.bfloat16)

    # ---- dt path: small matmul + RMSNorm + VPU broadcast-FMA dt_proj ----
    dtr = jnp.dot(xf16, w_dt_ref[...], preferred_element_type=jnp.float32)
    dtr = _rms(dtr, dtln_w_ref[...])                # (T, R)
    dtp_w = dtp_w_ref[...]                          # (R, Din)
    dlin = dtr[:, 0:1] * dtp_w[0:1, :]
    for r in range(1, R):
        dlin = dlin + dtr[:, r:r + 1] * dtp_w[r:r + 1, :]
    d_ref[...] = _softplus(dlin + dtp_b_ref[...])   # (T, Din) delta, staged

    # ---- B/C path: NT matmul gives (2*Ds, T) directly (no transpose) ----
    bct = lax.dot_general(w_bct_ref[...], xf16, (((1,), (1,)), ((), ())),
                          preferred_element_type=jnp.float32)   # (2*Ds, T)
    bT = bct[0:Ds, :]
    cT = bct[Ds:2 * Ds, :]
    # RMSNorm over d_state as a sublane reduce (lane-dense)
    bT = bT * lax.rsqrt(jnp.mean(bT * bT, axis=0, keepdims=True) + EPS) * bln_w_ref[...]
    cT = cT * lax.rsqrt(jnp.mean(cT * cT, axis=0, keepdims=True) + EPS) * cln_w_ref[...]
    # pre-split into per-sub-chunk (Ds, SUB) blocks: the scan loop then only
    # uses leading-dim dynamic indexing (no MXU / lane-dynamic slices inside)
    for j in range(NSUB):
        b_ref[j] = bT[:, j * SUB:(j + 1) * SUB]
        c_ref[j] = cT[:, j * SUB:(j + 1) * SUB]

    # ---- selective scan, state layout (Ds, Din): Din on lanes,
    #      blocked along Din to bound register pressure ----
    for ti in range(Din // DT):
        d0 = ti * DT
        A_t = A_T_ref[:, d0:d0 + DT]                # (Ds, DT) = -exp(A_log).T

        def sub_chunk(s, h):
            base = pl.multiple_of(s * SUB, SUB)
            d_blk = d_ref[pl.ds(base, SUB), d0:d0 + DT]          # (SUB, DT)
            u_blk = d_blk * xf_ref[pl.ds(base, SUB), d0:d0 + DT]  # (SUB, DT)
            bt = b_ref[s]                                        # (Ds, SUB)
            ct = c_ref[s]                                        # (Ds, SUB)
            rows = []
            for i in range(SUB):
                dA = jnp.exp(d_blk[i:i + 1, :] * A_t)            # (Ds, DT)
                h = dA * h + bt[:, i:i + 1] * u_blk[i:i + 1, :]
                rows.append(jnp.sum(h * ct[:, i:i + 1], axis=0, keepdims=True))
            y_ref[pl.ds(base, SUB), d0:d0 + DT] = jnp.concatenate(rows, axis=0)
            return h

        h_t = lax.fori_loop(0, NSUB, sub_chunk, h_ref[:, d0:d0 + DT])
        h_ref[:, d0:d0 + DT] = h_t                  # carry state to next chunk

    # ---- skip term, gate, out_proj, residual add ----
    y = y_ref[...] + D_ref[...] * xf_ref[...]
    out = (y * _silu(z_ref[...])).astype(jnp.bfloat16)
    out = jnp.dot(out, out_w_ref[...], preferred_element_type=jnp.float32)
    o_ref[0] = x_ref[0] + out


def residual_mamba_block(x, p, *, time_chunk=128,
                         vmem_limit_bytes=48 * 1024 * 1024):
    Bb, L, Dm = x.shape
    Din = p["D"].shape[1]
    Ds = p["A_T"].shape[0]
    K = p["conv_w"].shape[0]
    R = p["dtp_w"].shape[0]

    T = min(time_chunk, L)
    assert L % T == 0, "sequence length must be divisible by the time chunk"
    assert T % SUB == 0, "time chunk must be a multiple of 8"
    assert K >= 2 and T >= K - 1, "time chunk must cover the conv halo"
    NC = L // T
    NSUB = T // SUB
    HP = ((K - 1 + 7) // 8) * 8                     # halo region, 8-aligned

    full = lambda b, c: (0, 0)
    xmap = lambda b, c: (b, c, 0)

    mm_flops = 2 * Bb * L * (Dm * 2 * Din + Din * (R + 2 * Ds) + Din * Dm)
    cost = pl.CostEstimate(
        flops=mm_flops + 10 * Bb * L * Ds * Din,
        transcendentals=Bb * L * (Ds * Din + 4 * Din),
        bytes_accessed=8 * Bb * L * Dm
        + 2 * (Dm * 2 * Din + Din * (R + 2 * Ds) + Din * Dm),
    )

    kernel = pl.pallas_call(
        residual_mamba_block_kernel,
        out_shape=jax.ShapeDtypeStruct((Bb, L, Dm), jnp.float32),
        grid=(Bb, NC),
        in_specs=[
            pl.BlockSpec((1, T, Dm), xmap),              # x
            pl.BlockSpec((1, Dm), full),                 # norm_w
            pl.BlockSpec((Dm, 2 * Din), full),           # w_in (bf16)
            pl.BlockSpec((K, Din), full),                # conv_w
            pl.BlockSpec((1, Din), full),                # conv_b
            pl.BlockSpec((Din, R), full),                # w_dt (bf16)
            pl.BlockSpec((2 * Ds, Din), full),           # w_bcT (bf16)
            pl.BlockSpec((1, R), full),                  # dt layernorm w
            pl.BlockSpec((Ds, 1), full),                 # B layernorm w
            pl.BlockSpec((Ds, 1), full),                 # C layernorm w
            pl.BlockSpec((R, Din), full),                # dt_proj w
            pl.BlockSpec((1, Din), full),                # dt_proj b
            pl.BlockSpec((Ds, Din), full),               # A_T = -exp(A_log).T
            pl.BlockSpec((1, Din), full),                # D
            pl.BlockSpec((Din, Dm), full),               # out_proj w (bf16)
        ],
        out_specs=pl.BlockSpec((1, T, Dm), xmap),
        scratch_shapes=[
            pltpu.VMEM((Ds, Din), jnp.float32),          # h (carried)
            pltpu.VMEM((HP + T, Din), jnp.float32),      # conv input + halo
            pltpu.VMEM((T, Din), jnp.float32),           # xf (staged)
            pltpu.VMEM((T, Din), jnp.float32),           # z  (staged)
            pltpu.VMEM((T, Din), jnp.float32),           # delta
            pltpu.VMEM((T, Din), jnp.float32),           # y
            pltpu.VMEM((NSUB, Ds, SUB), jnp.float32),    # B, per-sub-chunk
            pltpu.VMEM((NSUB, Ds, SUB), jnp.float32),    # C, per-sub-chunk
        ],
        input_output_aliases={0: 0},
        compiler_params=pltpu.CompilerParams(
            dimension_semantics=("parallel", "arbitrary"),
            vmem_limit_bytes=vmem_limit_bytes,
        ),
        cost_estimate=cost,
    )
    return kernel(
        x, p["norm_w"], p["w_in"], p["conv_w"], p["conv_b"], p["w_dt"],
        p["w_bcT"], p["dtln_w"], p["Bln_w"], p["Cln_w"], p["dtp_w"],
        p["dtp_b"], p["A_T"], p["D"], p["out_w"])


def mamba_forward(x, layer_params, *, time_chunk=128):
    for p in layer_params:
        x = residual_mamba_block(x, p, time_chunk=time_chunk)
    return x


# ---------------- deterministic parameter initialization ----------------
def init_layer_params(key, d_model, expand_factor, d_conv, dt_rank, d_state,
                      dt_scale=1.0, dt_max=0.1, dt_min=0.001, dt_init_floor=1e-4):
    d_inner = d_model * expand_factor
    ks = jax.random.split(key, 7)

    def unif(k, shape, bound):
        return jax.random.uniform(k, shape, jnp.float32, -bound, bound)

    in_w = unif(ks[0], (2 * d_inner, d_model), 1.0 / math.sqrt(d_model))
    conv_w = unif(ks[1], (d_inner, d_conv), 1.0 / math.sqrt(d_conv))
    conv_b = unif(ks[2], (d_inner,), 1.0 / math.sqrt(d_conv))
    x_proj_w = unif(ks[3], (dt_rank + 2 * d_state, d_inner), 1.0 / math.sqrt(d_inner))

    dt_init_std = dt_rank ** (-0.5) * dt_scale
    dt_w = unif(ks[4], (d_inner, dt_rank), dt_init_std)
    dt = jnp.exp(jax.random.uniform(ks[5], (d_inner,), jnp.float32)
                 * (math.log(dt_max) - math.log(dt_min)) + math.log(dt_min))
    dt = jnp.maximum(dt, dt_init_floor)
    inv_dt = dt + jnp.log(-jnp.expm1(-dt))

    A_log = jnp.log(jnp.tile(jnp.arange(1, d_state + 1, dtype=jnp.float32)[None, :],
                             (d_inner, 1)))                  # (Din, Ds)
    out_w = unif(ks[6], (d_model, d_inner), 1.0 / math.sqrt(d_inner))

    return dict(
        norm_w=jnp.ones((1, d_model), jnp.float32),
        w_in=in_w.T.astype(jnp.bfloat16),                    # (Dm, 2*Din)
        conv_w=conv_w.T,                                     # (K, Din)
        conv_b=conv_b[None, :],                              # (1, Din)
        w_dt=x_proj_w[:dt_rank, :].T.astype(jnp.bfloat16),   # (Din, R)
        w_bcT=x_proj_w[dt_rank:, :].astype(jnp.bfloat16),    # (2*Ds, Din), pre-T
        dtln_w=jnp.ones((1, dt_rank), jnp.float32),
        Bln_w=jnp.ones((d_state, 1), jnp.float32),           # (Ds, 1)
        Cln_w=jnp.ones((d_state, 1), jnp.float32),           # (Ds, 1)
        dtp_w=dt_w.T,                                        # (R, Din)
        dtp_b=inv_dt[None, :],                               # (1, Din)
        A_T=(-jnp.exp(A_log)).T,                             # (Ds, Din)
        D=jnp.ones((1, d_inner), jnp.float32),               # (1, Din)
        out_w=out_w.T.astype(jnp.bfloat16),                  # (Din, Dm)
    )


# ---------------- pure-JAX reference (same math, outside Pallas) ----------------
def _mm_bf16(a, w_bf16):
    return jnp.dot(a.astype(jnp.bfloat16), w_bf16, preferred_element_type=jnp.float32)


def ref_residual_block(x, p):
    Bb, L, Dm = x.shape
    Din = p["D"].shape[1]
    Ds = p["A_T"].shape[0]
    K = p["conv_w"].shape[0]

    xn = _rms(x, p["norm_w"])
    xz = _mm_bf16(xn, p["w_in"])
    xf, z = xz[..., :Din], xz[..., Din:]
    xpad = jnp.pad(xf, ((0, 0), (K - 1, 0), (0, 0)))
    conv = p["conv_b"] + sum(xpad[:, k:k + L, :] * p["conv_w"][k] for k in range(K))
    xf = _silu(conv)
    dtr = _rms(_mm_bf16(xf, p["w_dt"]), p["dtln_w"])
    bc = _mm_bf16(xf, p["w_bcT"].T)
    Bm, Cm = bc[..., :Ds], bc[..., Ds:]
    Bm = Bm * lax.rsqrt(jnp.mean(Bm * Bm, axis=-1, keepdims=True) + EPS) * p["Bln_w"][:, 0]
    Cm = Cm * lax.rsqrt(jnp.mean(Cm * Cm, axis=-1, keepdims=True) + EPS) * p["Cln_w"][:, 0]
    delta = _softplus(jnp.einsum("blr,rd->bld", dtr, p["dtp_w"]) + p["dtp_b"])
    A = p["A_T"].T                                   # (Din, Ds) = -exp(A_log)
    h = jnp.zeros((Bb, Din, Ds), jnp.float32)
    ys = []
    for t in range(L):
        dA = jnp.exp(delta[:, t, :, None] * A)
        dBx = delta[:, t, :, None] * Bm[:, t, None, :] * xf[:, t, :, None]
        h = dA * h + dBx
        ys.append(jnp.sum(h * Cm[:, t, None, :], axis=-1))
    y = jnp.stack(ys, axis=1) + p["D"] * xf
    out = _mm_bf16(y * _silu(z), p["out_w"])
    return x + out


if __name__ == "__main__":
    # small, Mamba-default-consistent shapes
    d_model = 32
    n_layers = 2
    expand_factor = 2
    d_conv = 8
    d_state = 16
    dt_rank = math.ceil(d_model / 16)    # 'auto' -> 2
    B, L = 2, 32

    key = jax.random.PRNGKey(0)
    keys = jax.random.split(key, n_layers + 1)
    x = jax.random.normal(keys[0], (B, L, d_model), jnp.float32)
    layer_params = [
        init_layer_params(keys[i + 1], d_model, expand_factor, d_conv, dt_rank, d_state)
        for i in range(n_layers)
    ]

    # reference first (kernel aliases/donates its input buffers layer-to-layer)
    ref = x
    for p in layer_params:
        ref = ref_residual_block(ref, p)
    ref = jax.block_until_ready(ref)

    out = mamba_forward(x, layer_params, time_chunk=128)
    out = jax.block_until_ready(out)

    assert out.shape == (B, L, d_model)
    assert bool(jnp.all(jnp.isfinite(out)))
    assert bool(jnp.allclose(out, ref, rtol=2e-2, atol=2e-2)), "kernel/reference mismatch"
    print("KERNEL_OK")
</pallas_src>

<mosaic_0001>
module attributes {stable_mosaic.version = 11 : i64} {
  func.func @residual_mamba_block_kernel(%arg0: i32, %arg1: i32, %arg2: memref<1x32x32xf32, #tpu.memory_space<vmem>>, %arg3: memref<1x32xf32, #tpu.memory_space<vmem>>, %arg4: memref<32x128xbf16, #tpu.memory_space<vmem>>, %arg5: memref<8x64xf32, #tpu.memory_space<vmem>>, %arg6: memref<1x64xf32, #tpu.memory_space<vmem>>, %arg7: memref<64x2xbf16, #tpu.memory_space<vmem>>, %arg8: memref<32x64xbf16, #tpu.memory_space<vmem>>, %arg9: memref<1x2xf32, #tpu.memory_space<vmem>>, %arg10: memref<16x1xf32, #tpu.memory_space<vmem>>, %arg11: memref<16x1xf32, #tpu.memory_space<vmem>>, %arg12: memref<2x64xf32, #tpu.memory_space<vmem>>, %arg13: memref<1x64xf32, #tpu.memory_space<vmem>>, %arg14: memref<16x64xf32, #tpu.memory_space<vmem>>, %arg15: memref<1x64xf32, #tpu.memory_space<vmem>>, %arg16: memref<64x32xbf16, #tpu.memory_space<vmem>>, %arg17: memref<1x32x32xf32, #tpu.memory_space<vmem>>, %arg18: memref<16x64xf32, #tpu.memory_space<vmem>>, %arg19: memref<40x64xf32, #tpu.memory_space<vmem>>, %arg20: memref<32x64xf32, #tpu.memory_space<vmem>>, %arg21: memref<32x64xf32, #tpu.memory_space<vmem>>, %arg22: memref<32x64xf32, #tpu.memory_space<vmem>>, %arg23: memref<32x64xf32, #tpu.memory_space<vmem>>, %arg24: memref<4x16x8xf32, #tpu.memory_space<vmem>>, %arg25: memref<4x16x8xf32, #tpu.memory_space<vmem>>) attributes {dimension_semantics = [#tpu.dimension_semantics<parallel>, #tpu.dimension_semantics<arbitrary>], iteration_bounds = array<i64: 2, 1>, scalar_prefetch = 0 : i64, scratch_operands = 8 : i64, tpu.core_type = #tpu.core_type<tc>, window_params = [{transform_indices = @transform_0, window_bounds = array<i64: 1, 32, 32>}, {pipeline_mode = #tpu.pipeline_mode<synchronous>, transform_indices = @transform_1, window_bounds = array<i64: 1, 32>}, {pipeline_mode = #tpu.pipeline_mode<synchronous>, transform_indices = @transform_2, window_bounds = array<i64: 32, 128>}, {pipeline_mode = #tpu.pipeline_mode<synchronous>, transform_indices = @transform_3, window_bounds = array<i64: 8, 64>}, {pipeline_mode = #tpu.pipeline_mode<synchronous>, transform_indices = @transform_4, window_bounds = array<i64: 1, 64>}, {pipeline_mode = #tpu.pipeline_mode<synchronous>, transform_indices = @transform_5, window_bounds = array<i64: 64, 2>}, {pipeline_mode = #tpu.pipeline_mode<synchronous>, transform_indices = @transform_6, window_bounds = array<i64: 32, 64>}, {pipeline_mode = #tpu.pipeline_mode<synchronous>, transform_indices = @transform_7, window_bounds = array<i64: 1, 2>}, {pipeline_mode = #tpu.pipeline_mode<synchronous>, transform_indices = @transform_8, window_bounds = array<i64: 16, 1>}, {pipeline_mode = #tpu.pipeline_mode<synchronous>, transform_indices = @transform_9, window_bounds = array<i64: 16, 1>}, {pipeline_mode = #tpu.pipeline_mode<synchronous>, transform_indices = @transform_10, window_bounds = array<i64: 2, 64>}, {pipeline_mode = #tpu.pipeline_mode<synchronous>, transform_indices = @transform_11, window_bounds = array<i64: 1, 64>}, {pipeline_mode = #tpu.pipeline_mode<synchronous>, transform_indices = @transform_12, window_bounds = array<i64: 16, 64>}, {pipeline_mode = #tpu.pipeline_mode<synchronous>, transform_indices = @transform_13, window_bounds = array<i64: 1, 64>}, {pipeline_mode = #tpu.pipeline_mode<synchronous>, transform_indices = @transform_14, window_bounds = array<i64: 64, 32>}, {transform_indices = @transform_15, window_bounds = array<i64: 1, 32, 32>}]} {
    %c0_i32 = arith.constant 0 : i32
    %0 = arith.cmpi eq, %arg1, %c0_i32 : i32
    %1 = arith.extui %0 : i1 to i32
    %c0_i32_0 = arith.constant 0 : i32
    %2 = arith.cmpi ne, %1, %c0_i32_0 : i32
    scf.if %2 {
      %cst_111 = arith.constant 0.000000e+00 : f32
      %206 = vector.broadcast %cst_111 : f32 to vector<16x64xf32>
      %c0_112 = arith.constant 0 : index
      %c0_113 = arith.constant 0 : index
      %207 = vector.load %arg18[%c0_112, %c0_113] : memref<16x64xf32, #tpu.memory_space<vmem>>, vector<16x64xf32>
      tpu.vector_store %arg18[%c0_112, %c0_113], %206 {strides = array<i32>} : memref<16x64xf32, #tpu.memory_space<vmem>>, vector<16x64xf32>,
      %cst_114 = arith.constant 0.000000e+00 : f32
      %208 = vector.broadcast %cst_114 : f32 to vector<8x64xf32>
      %c0_115 = arith.constant 0 : index
      %c0_116 = arith.constant 0 : index
      %209 = vector.load %arg19[%c0_115, %c0_116] : memref<40x64xf32, #tpu.memory_space<vmem>>, vector<8x64xf32>
      tpu.vector_store %arg19[%c0_115, %c0_116], %208 {strides = array<i32>} : memref<40x64xf32, #tpu.memory_space<vmem>>, vector<8x64xf32>,
    } else {
    }
    %c0 = arith.constant 0 : index
    %c0_1 = arith.constant 0 : index
    %c0_2 = arith.constant 0 : index
    %3 = vector.load %arg2[%c0, %c0_1, %c0_2] : memref<1x32x32xf32, #tpu.memory_space<vmem>>, vector<1x32x32xf32>
    %4 = vector.shape_cast %3 : vector<1x32x32xf32> to vector<32x32xf32>
    %c0_3 = arith.constant 0 : index
    %c0_4 = arith.constant 0 : index
    %5 = vector.load %arg3[%c0_3, %c0_4] : memref<1x32xf32, #tpu.memory_space<vmem>>, vector<1x32xf32>
    %6 = arith.mulf %4, %4 : vector<32x32xf32>
    %cst = arith.constant dense<0.000000e+00> : vector<32xf32>
    %7 = vector.multi_reduction <add>, %6, %cst [1] : vector<32x32xf32> to vector<32xf32>
    %8 = vector.shape_cast %7 : vector<32xf32> to vector<32x1xf32>
    %cst_5 = arith.constant 3.200000e+01 : f32
    %9 = vector.broadcast %cst_5 : f32 to vector<32x1xf32>
    %10 = arith.divf %8, %9 : vector<32x1xf32>
    %cst_6 = arith.constant 9.99999974E-6 : f32
    %11 = vector.broadcast %cst_6 : f32 to vector<32x1xf32>
    %12 = arith.addf %10, %11 : vector<32x1xf32>
    %13 = math.rsqrt %12 : vector<32x1xf32>
    %14 = vector.broadcast %13 : vector<32x1xf32> to vector<32x32xf32>
    %15 = arith.mulf %4, %14 : vector<32x32xf32>
    %16 = vector.broadcast %5 : vector<1x32xf32> to vector<32x32xf32>
    %17 = arith.mulf %15, %16 : vector<32x32xf32>
    %18 = arith.truncf %17 : vector<32x32xf32> to vector<32x32xbf16>
    %c0_7 = arith.constant 0 : index
    %c0_8 = arith.constant 0 : index
    %19 = vector.load %arg4[%c0_7, %c0_8] : memref<32x128xbf16, #tpu.memory_space<vmem>>, vector<32x128xbf16>
    %cst_9 = arith.constant dense<0.000000e+00> : vector<32x128xf32>
    %20 = tpu.matmul %18, %19, %cst_9 {dimension_numbers = #tpu.dot_dimension_numbers<[1], [0], [0], [1], [0, 0, 1, 1], [], []>} : vector<32x32xbf16>, vector<32x128xbf16>, vector<32x128xf32> -> vector<32x128xf32>
    %21 = vector.extract_strided_slice %20 {offsets = [0, 64], sizes = [32, 64], strides = [1, 1]} : vector<32x128xf32> to vector<32x64xf32>
    %c0_10 = arith.constant 0 : index
    %c0_11 = arith.constant 0 : index
    %22 = vector.load %arg21[%c0_10, %c0_11] : memref<32x64xf32, #tpu.memory_space<vmem>>, vector<32x64xf32>
    tpu.vector_store %arg21[%c0_10, %c0_11], %21 {strides = array<i32>} : memref<32x64xf32, #tpu.memory_space<vmem>>, vector<32x64xf32>,
    %23 = vector.extract_strided_slice %20 {offsets = [0, 0], sizes = [32, 64], strides = [1, 1]} : vector<32x128xf32> to vector<32x64xf32>
    %c8 = arith.constant 8 : index
    %c0_12 = arith.constant 0 : index
    %24 = vector.load %arg19[%c8, %c0_12] : memref<40x64xf32, #tpu.memory_space<vmem>>, vector<32x64xf32>
    tpu.vector_store %arg19[%c8, %c0_12], %23 {strides = array<i32>} : memref<40x64xf32, #tpu.memory_space<vmem>>, vector<32x64xf32>,
    %c0_13 = arith.constant 0 : index
    %c0_14 = arith.constant 0 : index
    %25 = vector.load %arg5[%c0_13, %c0_14] : memref<8x64xf32, #tpu.memory_space<vmem>>, vector<8x64xf32>
    %c0_15 = arith.constant 0 : index
    %c0_16 = arith.constant 0 : index
    %26 = vector.load %arg6[%c0_15, %c0_16] : memref<1x64xf32, #tpu.memory_space<vmem>>, vector<1x64xf32>
    %c1 = arith.constant 1 : index
    %c0_17 = arith.constant 0 : index
    %27 = vector.load %arg19[%c1, %c0_17] : memref<40x64xf32, #tpu.memory_space<vmem>>, vector<32x64xf32>
    %28 = vector.extract_strided_slice %25 {offsets = [0, 0], sizes = [1, 64], strides = [1, 1]} : vector<8x64xf32> to vector<1x64xf32>
    %29 = vector.broadcast %28 : vector<1x64xf32> to vector<32x64xf32>
    %30 = arith.mulf %27, %29 : vector<32x64xf32>
    %31 = vector.broadcast %26 : vector<1x64xf32> to vector<32x64xf32>
    %32 = arith.addf %31, %30 : vector<32x64xf32>
    %c2 = arith.constant 2 : index
    %c0_18 = arith.constant 0 : index
    %33 = vector.load %arg19[%c2, %c0_18] : memref<40x64xf32, #tpu.memory_space<vmem>>, vector<32x64xf32>
    %34 = vector.extract_strided_slice %25 {offsets = [1, 0], sizes = [1, 64], strides = [1, 1]} : vector<8x64xf32> to vector<1x64xf32>
    %35 = vector.broadcast %34 : vector<1x64xf32> to vector<32x64xf32>
    %36 = arith.mulf %33, %35 : vector<32x64xf32>
    %37 = arith.addf %32, %36 : vector<32x64xf32>
    %c3 = arith.constant 3 : index
    %c0_19 = arith.constant 0 : index
    %38 = vector.load %arg19[%c3, %c0_19] : memref<40x64xf32, #tpu.memory_space<vmem>>, vector<32x64xf32>
    %39 = vector.extract_strided_slice %25 {offsets = [2, 0], sizes = [1, 64], strides = [1, 1]} : vector<8x64xf32> to vector<1x64xf32>
    %40 = vector.broadcast %39 : vector<1x64xf32> to vector<32x64xf32>
    %41 = arith.mulf %38, %40 : vector<32x64xf32>
    %42 = arith.addf %37, %41 : vector<32x64xf32>
    %c4 = arith.constant 4 : index
    %c0_20 = arith.constant 0 : index
    %43 = vector.load %arg19[%c4, %c0_20] : memref<40x64xf32, #tpu.memory_space<vmem>>, vector<32x64xf32>
    %44 = vector.extract_strided_slice %25 {offsets = [3, 0], sizes = [1, 64], strides = [1, 1]} : vector<8x64xf32> to vector<1x64xf32>
    %45 = vector.broadcast %44 : vector<1x64xf32> to vector<32x64xf32>
    %46 = arith.mulf %43, %45 : vector<32x64xf32>
    %47 = arith.addf %42, %46 : vector<32x64xf32>
    %c5 = arith.constant 5 : index
    %c0_21 = arith.constant 0 : index
    %48 = vector.load %arg19[%c5, %c0_21] : memref<40x64xf32, #tpu.memory_space<vmem>>, vector<32x64xf32>
    %49 = vector.extract_strided_slice %25 {offsets = [4, 0], sizes = [1, 64], strides = [1, 1]} : vector<8x64xf32> to vector<1x64xf32>
    %50 = vector.broadcast %49 : vector<1x64xf32> to vector<32x64xf32>
    %51 = arith.mulf %48, %50 : vector<32x64xf32>
    %52 = arith.addf %47, %51 : vector<32x64xf32>
    %c6 = arith.constant 6 : index
    %c0_22 = arith.constant 0 : index
    %53 = vector.load %arg19[%c6, %c0_22] : memref<40x64xf32, #tpu.memory_space<vmem>>, vector<32x64xf32>
    %54 = vector.extract_strided_slice %25 {offsets = [5, 0], sizes = [1, 64], strides = [1, 1]} : vector<8x64xf32> to vector<1x64xf32>
    %55 = vector.broadcast %54 : vector<1x64xf32> to vector<32x64xf32>
    %56 = arith.mulf %53, %55 : vector<32x64xf32>
    %57 = arith.addf %52, %56 : vector<32x64xf32>
    %c7 = arith.constant 7 : index
    %c0_23 = arith.constant 0 : index
    %58 = vector.load %arg19[%c7, %c0_23] : memref<40x64xf32, #tpu.memory_space<vmem>>, vector<32x64xf32>
    %59 = vector.extract_strided_slice %25 {offsets = [6, 0], sizes = [1, 64], strides = [1, 1]} : vector<8x64xf32> to vector<1x64xf32>
    %60 = vector.broadcast %59 : vector<1x64xf32> to vector<32x64xf32>
    %61 = arith.mulf %58, %60 : vector<32x64xf32>
    %62 = arith.addf %57, %61 : vector<32x64xf32>
    %c8_24 = arith.constant 8 : index
    %c0_25 = arith.constant 0 : index
    %63 = vector.load %arg19[%c8_24, %c0_25] : memref<40x64xf32, #tpu.memory_space<vmem>>, vector<32x64xf32>
    %64 = vector.extract_strided_slice %25 {offsets = [7, 0], sizes = [1, 64], strides = [1, 1]} : vector<8x64xf32> to vector<1x64xf32>
    %65 = vector.broadcast %64 : vector<1x64xf32> to vector<32x64xf32>
    %66 = arith.mulf %63, %65 : vector<32x64xf32>
    %67 = arith.addf %62, %66 : vector<32x64xf32>
    %c33 = arith.constant 33 : index
    %c0_26 = arith.constant 0 : index
    %68 = vector.load %arg19[%c33, %c0_26] : memref<40x64xf32, #tpu.memory_space<vmem>>, vector<7x64xf32>
    %c1_27 = arith.constant 1 : index
    %c0_28 = arith.constant 0 : index
    %69 = vector.load %arg19[%c1_27, %c0_28] : memref<40x64xf32, #tpu.memory_space<vmem>>, vector<7x64xf32>
    tpu.vector_store %arg19[%c1_27, %c0_28], %68 {strides = array<i32>} : memref<40x64xf32, #tpu.memory_space<vmem>>, vector<7x64xf32>,
    %70 = arith.negf %67 : vector<32x64xf32>
    %71 = math.exp %70 : vector<32x64xf32>
    %cst_29 = arith.constant 1.000000e+00 : f32
    %72 = vector.broadcast %cst_29 : f32 to vector<32x64xf32>
    %73 = arith.addf %72, %71 : vector<32x64xf32>
    %74 = arith.divf %72, %73 : vector<32x64xf32>
    %75 = arith.mulf %67, %74 : vector<32x64xf32>
    %c0_30 = arith.constant 0 : index
    %c0_31 = arith.constant 0 : index
    %76 = vector.load %arg20[%c0_30, %c0_31] : memref<32x64xf32, #tpu.memory_space<vmem>>, vector<32x64xf32>
    tpu.vector_store %arg20[%c0_30, %c0_31], %75 {strides = array<i32>} : memref<32x64xf32, #tpu.memory_space<vmem>>, vector<32x64xf32>,
    %77 = arith.truncf %75 : vector<32x64xf32> to vector<32x64xbf16>
    %c0_32 = arith.constant 0 : index
    %c0_33 = arith.constant 0 : index
    %78 = vector.load %arg7[%c0_32, %c0_33] : memref<64x2xbf16, #tpu.memory_space<vmem>>, vector<64x2xbf16>
    %cst_34 = arith.constant dense<0.000000e+00> : vector<32x2xf32>
    %79 = tpu.matmul %77, %78, %cst_34 {dimension_numbers = #tpu.dot_dimension_numbers<[1], [0], [0], [1], [0, 0, 1, 1], [], []>} : vector<32x64xbf16>, vector<64x2xbf16>, vector<32x2xf32> -> vector<32x2xf32>
    %c0_35 = arith.constant 0 : index
    %c0_36 = arith.constant 0 : index
    %80 = vector.load %arg9[%c0_35, %c0_36] : memref<1x2xf32, #tpu.memory_space<vmem>>, vector<1x2xf32>
    %81 = arith.mulf %79, %79 : vector<32x2xf32>
    %cst_37 = arith.constant dense<0.000000e+00> : vector<32xf32>
    %82 = vector.multi_reduction <add>, %81, %cst_37 [1] : vector<32x2xf32> to vector<32xf32>
    %83 = vector.shape_cast %82 : vector<32xf32> to vector<32x1xf32>
    %cst_38 = arith.constant 2.000000e+00 : f32
    %84 = vector.broadcast %cst_38 : f32 to vector<32x1xf32>
    %85 = arith.divf %83, %84 : vector<32x1xf32>
    %cst_39 = arith.constant 9.99999974E-6 : f32
    %86 = vector.broadcast %cst_39 : f32 to vector<32x1xf32>
    %87 = arith.addf %85, %86 : vector<32x1xf32>
    %88 = math.rsqrt %87 : vector<32x1xf32>
    %89 = vector.broadcast %88 : vector<32x1xf32> to vector<32x2xf32>
    %90 = arith.mulf %79, %89 : vector<32x2xf32>
    %91 = vector.broadcast %80 : vector<1x2xf32> to vector<32x2xf32>
    %92 = arith.mulf %90, %91 : vector<32x2xf32>
    %c0_40 = arith.constant 0 : index
    %c0_41 = arith.constant 0 : index
    %93 = vector.load %arg12[%c0_40, %c0_41] : memref<2x64xf32, #tpu.memory_space<vmem>>, vector<2x64xf32>
    %94 = vector.extract_strided_slice %92 {offsets = [0, 0], sizes = [32, 1], strides = [1, 1]} : vector<32x2xf32> to vector<32x1xf32>
    %95 = vector.extract_strided_slice %93 {offsets = [0, 0], sizes = [1, 64], strides = [1, 1]} : vector<2x64xf32> to vector<1x64xf32>
    %96 = vector.broadcast %94 : vector<32x1xf32> to vector<32x64xf32>
    %97 = vector.broadcast %95 : vector<1x64xf32> to vector<32x64xf32>
    %98 = arith.mulf %96, %97 : vector<32x64xf32>
    %99 = vector.extract_strided_slice %92 {offsets = [0, 1], sizes = [32, 1], strides = [1, 1]} : vector<32x2xf32> to vector<32x1xf32>
    %100 = vector.extract_strided_slice %93 {offsets = [1, 0], sizes = [1, 64], strides = [1, 1]} : vector<2x64xf32> to vector<1x64xf32>
    %101 = vector.broadcast %99 : vector<32x1xf32> to vector<32x64xf32>
    %102 = vector.broadcast %100 : vector<1x64xf32> to vector<32x64xf32>
    %103 = arith.mulf %101, %102 : vector<32x64xf32>
    %104 = arith.addf %98, %103 : vector<32x64xf32>
    %c0_42 = arith.constant 0 : index
    %c0_43 = arith.constant 0 : index
    %105 = vector.load %arg13[%c0_42, %c0_43] : memref<1x64xf32, #tpu.memory_space<vmem>>, vector<1x64xf32>
    %106 = vector.broadcast %105 : vector<1x64xf32> to vector<32x64xf32>
    %107 = arith.addf %104, %106 : vector<32x64xf32>
    %cst_44 = arith.constant 2.000000e+01 : f32
    %108 = vector.broadcast %cst_44 : f32 to vector<32x64xf32>
    %109 = arith.cmpf ogt, %107, %108 : vector<32x64xf32>
    %cst_45 = arith.constant 2.000000e+01 : f32
    %110 = vector.broadcast %cst_45 : f32 to vector<32x64xf32>
    %111 = arith.minimumf %107, %110 : vector<32x64xf32>
    %112 = math.exp %111 : vector<32x64xf32>
    %113 = math.log1p %112 : vector<32x64xf32>
    %114 = arith.select %109, %107, %113 : vector<32x64xi1>, vector<32x64xf32>
    %c0_46 = arith.constant 0 : index
    %c0_47 = arith.constant 0 : index
    %115 = vector.load %arg22[%c0_46, %c0_47] : memref<32x64xf32, #tpu.memory_space<vmem>>, vector<32x64xf32>
    tpu.vector_store %arg22[%c0_46, %c0_47], %114 {strides = array<i32>} : memref<32x64xf32, #tpu.memory_space<vmem>>, vector<32x64xf32>,
    %c0_48 = arith.constant 0 : index
    %c0_49 = arith.constant 0 : index
    %116 = vector.load %arg8[%c0_48, %c0_49] : memref<32x64xbf16, #tpu.memory_space<vmem>>, vector<32x64xbf16>
    %cst_50 = arith.constant dense<0.000000e+00> : vector<32x32xf32>
    %117 = tpu.matmul %116, %77, %cst_50 {dimension_numbers = #tpu.dot_dimension_numbers<[1], [1], [0], [0], [0, 0, 1, 0], [], []>} : vector<32x64xbf16>, vector<32x64xbf16>, vector<32x32xf32> -> vector<32x32xf32>
    %118 = vector.extract_strided_slice %117 {offsets = [0, 0], sizes = [16, 32], strides = [1, 1]} : vector<32x32xf32> to vector<16x32xf32>
    %119 = vector.extract_strided_slice %117 {offsets = [16, 0], sizes = [16, 32], strides = [1, 1]} : vector<32x32xf32> to vector<16x32xf32>
    %120 = arith.mulf %118, %118 : vector<16x32xf32>
    %cst_51 = arith.constant dense<0.000000e+00> : vector<32xf32>
    %121 = vector.multi_reduction <add>, %120, %cst_51 [0] : vector<16x32xf32> to vector<32xf32>
    %122 = vector.shape_cast %121 : vector<32xf32> to vector<1x32xf32>
    %cst_52 = arith.constant 1.600000e+01 : f32
    %123 = vector.broadcast %cst_52 : f32 to vector<1x32xf32>
    %124 = arith.divf %122, %123 : vector<1x32xf32>
    %cst_53 = arith.constant 9.99999974E-6 : f32
    %125 = vector.broadcast %cst_53 : f32 to vector<1x32xf32>
    %126 = arith.addf %124, %125 : vector<1x32xf32>
    %127 = math.rsqrt %126 : vector<1x32xf32>
    %128 = vector.broadcast %127 : vector<1x32xf32> to vector<16x32xf32>
    %129 = arith.mulf %118, %128 : vector<16x32xf32>
    %c0_54 = arith.constant 0 : index
    %c0_55 = arith.constant 0 : index
    %130 = vector.load %arg10[%c0_54, %c0_55] : memref<16x1xf32, #tpu.memory_space<vmem>>, vector<16x1xf32>
    %131 = vector.broadcast %130 : vector<16x1xf32> to vector<16x32xf32>
    %132 = arith.mulf %129, %131 : vector<16x32xf32>
    %133 = arith.mulf %119, %119 : vector<16x32xf32>
    %cst_56 = arith.constant dense<0.000000e+00> : vector<32xf32>
    %134 = vector.multi_reduction <add>, %133, %cst_56 [0] : vector<16x32xf32> to vector<32xf32>
    %135 = vector.shape_cast %134 : vector<32xf32> to vector<1x32xf32>
    %cst_57 = arith.constant 1.600000e+01 : f32
    %136 = vector.broadcast %cst_57 : f32 to vector<1x32xf32>
    %137 = arith.divf %135, %136 : vector<1x32xf32>
    %cst_58 = arith.constant 9.99999974E-6 : f32
    %138 = vector.broadcast %cst_58 : f32 to vector<1x32xf32>
    %139 = arith.addf %137, %138 : vector<1x32xf32>
    %140 = math.rsqrt %139 : vector<1x32xf32>
    %141 = vector.broadcast %140 : vector<1x32xf32> to vector<16x32xf32>
    %142 = arith.mulf %119, %141 : vector<16x32xf32>
    %c0_59 = arith.constant 0 : index
    %c0_60 = arith.constant 0 : index
    %143 = vector.load %arg11[%c0_59, %c0_60] : memref<16x1xf32, #tpu.memory_space<vmem>>, vector<16x1xf32>
    %144 = vector.broadcast %143 : vector<16x1xf32> to vector<16x32xf32>
    %145 = arith.mulf %142, %144 : vector<16x32xf32>
    %146 = vector.extract_strided_slice %132 {offsets = [0, 0], sizes = [16, 8], strides = [1, 1]} : vector<16x32xf32> to vector<16x8xf32>
    %c0_61 = arith.constant 0 : index
    %c0_62 = arith.constant 0 : index
    %c0_63 = arith.constant 0 : index
    %147 = vector.load %arg24[%c0_61, %c0_62, %c0_63] : memref<4x16x8xf32, #tpu.memory_space<vmem>>, vector<1x16x8xf32>
    %148 = vector.shape_cast %147 : vector<1x16x8xf32> to vector<16x8xf32>
    %149 = vector.shape_cast %146 : vector<16x8xf32> to vector<1x16x8xf32>
    tpu.vector_store %arg24[%c0_61, %c0_62, %c0_63], %149 {strides = array<i32>} : memref<4x16x8xf32, #tpu.memory_space<vmem>>, vector<1x16x8xf32>,
    %150 = vector.extract_strided_slice %145 {offsets = [0, 0], sizes = [16, 8], strides = [1, 1]} : vector<16x32xf32> to vector<16x8xf32>
    %c0_64 = arith.constant 0 : index
    %c0_65 = arith.constant 0 : index
    %c0_66 = arith.constant 0 : index
    %151 = vector.load %arg25[%c0_64, %c0_65, %c0_66] : memref<4x16x8xf32, #tpu.memory_space<vmem>>, vector<1x16x8xf32>
    %152 = vector.shape_cast %151 : vector<1x16x8xf32> to vector<16x8xf32>
    %153 = vector.shape_cast %150 : vector<16x8xf32> to vector<1x16x8xf32>
    tpu.vector_store %arg25[%c0_64, %c0_65, %c0_66], %153 {strides = array<i32>} : memref<4x16x8xf32, #tpu.memory_space<vmem>>, vector<1x16x8xf32>,
    %154 = vector.extract_strided_slice %132 {offsets = [0, 8], sizes = [16, 8], strides = [1, 1]} : vector<16x32xf32> to vector<16x8xf32>
    %c1_67 = arith.constant 1 : index
    %c0_68 = arith.constant 0 : index
    %c0_69 = arith.constant 0 : index
    %155 = vector.load %arg24[%c1_67, %c0_68, %c0_69] : memref<4x16x8xf32, #tpu.memory_space<vmem>>, vector<1x16x8xf32>
    %156 = vector.shape_cast %155 : vector<1x16x8xf32> to vector<16x8xf32>
    %157 = vector.shape_cast %154 : vector<16x8xf32> to vector<1x16x8xf32>
    tpu.vector_store %arg24[%c1_67, %c0_68, %c0_69], %157 {strides = array<i32>} : memref<4x16x8xf32, #tpu.memory_space<vmem>>, vector<1x16x8xf32>,
    %158 = vector.extract_strided_slice %145 {offsets = [0, 8], sizes = [16, 8], strides = [1, 1]} : vector<16x32xf32> to vector<16x8xf32>
    %c1_70 = arith.constant 1 : index
    %c0_71 = arith.constant 0 : index
    %c0_72 = arith.constant 0 : index
    %159 = vector.load %arg25[%c1_70, %c0_71, %c0_72] : memref<4x16x8xf32, #tpu.memory_space<vmem>>, vector<1x16x8xf32>
    %160 = vector.shape_cast %159 : vector<1x16x8xf32> to vector<16x8xf32>
    %161 = vector.shape_cast %158 : vector<16x8xf32> to vector<1x16x8xf32>
    tpu.vector_store %arg25[%c1_70, %c0_71, %c0_72], %161 {strides = array<i32>} : memref<4x16x8xf32, #tpu.memory_space<vmem>>, vector<1x16x8xf32>,
    %162 = vector.extract_strided_slice %132 {offsets = [0, 16], sizes = [16, 8], strides = [1, 1]} : vector<16x32xf32> to vector<16x8xf32>
    %c2_73 = arith.constant 2 : index
    %c0_74 = arith.constant 0 : index
    %c0_75 = arith.constant 0 : index
    %163 = vector.load %arg24[%c2_73, %c0_74, %c0_75] : memref<4x16x8xf32, #tpu.memory_space<vmem>>, vector<1x16x8xf32>
    %164 = vector.shape_cast %163 : vector<1x16x8xf32> to vector<16x8xf32>
    %165 = vector.shape_cast %162 : vector<16x8xf32> to vector<1x16x8xf32>
    tpu.vector_store %arg24[%c2_73, %c0_74, %c0_75], %165 {strides = array<i32>} : memref<4x16x8xf32, #tpu.memory_space<vmem>>, vector<1x16x8xf32>,
    %166 = vector.extract_strided_slice %145 {offsets = [0, 16], sizes = [16, 8], strides = [1, 1]} : vector<16x32xf32> to vector<16x8xf32>
    %c2_76 = arith.constant 2 : index
    %c0_77 = arith.constant 0 : index
    %c0_78 = arith.constant 0 : index
    %167 = vector.load %arg25[%c2_76, %c0_77, %c0_78] : memref<4x16x8xf32, #tpu.memory_space<vmem>>, vector<1x16x8xf32>
    %168 = vector.shape_cast %167 : vector<1x16x8xf32> to vector<16x8xf32>
    %169 = vector.shape_cast %166 : vector<16x8xf32> to vector<1x16x8xf32>
    tpu.vector_store %arg25[%c2_76, %c0_77, %c0_78], %169 {strides = array<i32>} : memref<4x16x8xf32, #tpu.memory_space<vmem>>, vector<1x16x8xf32>,
    %170 = vector.extract_strided_slice %132 {offsets = [0, 24], sizes = [16, 8], strides = [1, 1]} : vector<16x32xf32> to vector<16x8xf32>
    %c3_79 = arith.constant 3 : index
    %c0_80 = arith.constant 0 : index
    %c0_81 = arith.constant 0 : index
    %171 = vector.load %arg24[%c3_79, %c0_80, %c0_81] : memref<4x16x8xf32, #tpu.memory_space<vmem>>, vector<1x16x8xf32>
    %172 = vector.shape_cast %171 : vector<1x16x8xf32> to vector<16x8xf32>
    %173 = vector.shape_cast %170 : vector<16x8xf32> to vector<1x16x8xf32>
    tpu.vector_store %arg24[%c3_79, %c0_80, %c0_81], %173 {strides = array<i32>} : memref<4x16x8xf32, #tpu.memory_space<vmem>>, vector<1x16x8xf32>,
    %174 = vector.extract_strided_slice %145 {offsets = [0, 24], sizes = [16, 8], strides = [1, 1]} : vector<16x32xf32> to vector<16x8xf32>
    %c3_82 = arith.constant 3 : index
    %c0_83 = arith.constant 0 : index
    %c0_84 = arith.constant 0 : index
    %175 = vector.load %arg25[%c3_82, %c0_83, %c0_84] : memref<4x16x8xf32, #tpu.memory_space<vmem>>, vector<1x16x8xf32>
    %176 = vector.shape_cast %175 : vector<1x16x8xf32> to vector<16x8xf32>
    %177 = vector.shape_cast %174 : vector<16x8xf32> to vector<1x16x8xf32>
    tpu.vector_store %arg25[%c3_82, %c0_83, %c0_84], %177 {strides = array<i32>} : memref<4x16x8xf32, #tpu.memory_space<vmem>>, vector<1x16x8xf32>,
    %c0_85 = arith.constant 0 : index
    %c0_86 = arith.constant 0 : index
    %178 = vector.load %arg14[%c0_85, %c0_86] : memref<16x64xf32, #tpu.memory_space<vmem>>, vector<16x64xf32>
    %c0_87 = arith.constant 0 : index
    %c0_88 = arith.constant 0 : index
    %179 = vector.load %arg18[%c0_87, %c0_88] : memref<16x64xf32, #tpu.memory_space<vmem>>, vector<16x64xf32>
    %c0_i32_89 = arith.constant 0 : i32
    %c4_i32 = arith.constant 4 : i32
    %180 = arith.addi %c0_i32_89, %c4_i32 : i32
    %c1_i32 = arith.constant 1 : i32
    %181 = scf.for %arg26 = %c0_i32_89 to %180 step %c1_i32 iter_args(%arg27 = %179) -> (vector<16x64xf32>)  : i32 {
      %c8_i32 = arith.constant 8 : i32
      %206 = arith.muli %arg26, %c8_i32 : i32
      %207 = tpu.assume_multiple %206, 8 : i32
      %208 = arith.index_cast %207 : i32 to index
      %c0_111 = arith.constant 0 : index
      %209 = vector.load %arg22[%208, %c0_111] : memref<32x64xf32, #tpu.memory_space<vmem>>, vector<8x64xf32>
      %210 = arith.index_cast %207 : i32 to index
      %c0_112 = arith.constant 0 : index
      %211 = vector.load %arg20[%210, %c0_112] : memref<32x64xf32, #tpu.memory_space<vmem>>, vector<8x64xf32>
      %212 = arith.mulf %209, %211 : vector<8x64xf32>
      %213 = arith.index_cast %arg26 : i32 to index
      %c0_113 = arith.constant 0 : index
      %c0_114 = arith.constant 0 : index
      %214 = vector.load %arg24[%213, %c0_113, %c0_114] : memref<4x16x8xf32, #tpu.memory_space<vmem>>, vector<1x16x8xf32>
      %215 = vector.shape_cast %214 : vector<1x16x8xf32> to vector<16x8xf32>
      %216 = arith.index_cast %arg26 : i32 to index
      %c0_115 = arith.constant 0 : index
      %c0_116 = arith.constant 0 : index
      %217 = vector.load %arg25[%216, %c0_115, %c0_116] : memref<4x16x8xf32, #tpu.memory_space<vmem>>, vector<1x16x8xf32>
      %218 = vector.shape_cast %217 : vector<1x16x8xf32> to vector<16x8xf32>
      %219 = vector.extract_strided_slice %209 {offsets = [0, 0], sizes = [1, 64], strides = [1, 1]} : vector<8x64xf32> to vector<1x64xf32>
      %220 = vector.broadcast %219 : vector<1x64xf32> to vector<16x64xf32>
      %221 = arith.mulf %220, %178 : vector<16x64xf32>
      %222 = math.exp %221 : vector<16x64xf32>
      %223 = arith.mulf %222, %arg27 : vector<16x64xf32>
      %224 = vector.extract_strided_slice %215 {offsets = [0, 0], sizes = [16, 1], strides = [1, 1]} : vector<16x8xf32> to vector<16x1xf32>
      %225 = vector.extract_strided_slice %212 {offsets = [0, 0], sizes = [1, 64], strides = [1, 1]} : vector<8x64xf32> to vector<1x64xf32>
      %226 = vector.broadcast %224 : vector<16x1xf32> to vector<16x64xf32>
      %227 = vector.broadcast %225 : vector<1x64xf32> to vector<16x64xf32>
      %228 = arith.mulf %226, %227 : vector<16x64xf32>
      %229 = arith.addf %223, %228 : vector<16x64xf32>
      %230 = vector.extract_strided_slice %218 {offsets = [0, 0], sizes = [16, 1], strides = [1, 1]} : vector<16x8xf32> to vector<16x1xf32>
      %231 = vector.broadcast %230 : vector<16x1xf32> to vector<16x64xf32>
      %232 = arith.mulf %229, %231 : vector<16x64xf32>
      %cst_117 = arith.constant dense<0.000000e+00> : vector<64xf32>
      %233 = vector.multi_reduction <add>, %232, %cst_117 [0] : vector<16x64xf32> to vector<64xf32>
      %234 = vector.shape_cast %233 : vector<64xf32> to vector<1x64xf32>
      %235 = vector.extract_strided_slice %209 {offsets = [1, 0], sizes = [1, 64], strides = [1, 1]} : vector<8x64xf32> to vector<1x64xf32>
      %236 = vector.broadcast %235 : vector<1x64xf32> to vector<16x64xf32>
      %237 = arith.mulf %236, %178 : vector<16x64xf32>
      %238 = math.exp %237 : vector<16x64xf32>
      %239 = arith.mulf %238, %229 : vector<16x64xf32>
      %240 = vector.extract_strided_slice %215 {offsets = [0, 1], sizes = [16, 1], strides = [1, 1]} : vector<16x8xf32> to vector<16x1xf32>
      %241 = vector.extract_strided_slice %212 {offsets = [1, 0], sizes = [1, 64], strides = [1, 1]} : vector<8x64xf32> to vector<1x64xf32>
      %242 = vector.broadcast %240 : vector<16x1xf32> to vector<16x64xf32>
      %243 = vector.broadcast %241 : vector<1x64xf32> to vector<16x64xf32>
      %244 = arith.mulf %242, %243 : vector<16x64xf32>
      %245 = arith.addf %239, %244 : vector<16x64xf32>
      %246 = vector.extract_strided_slice %218 {offsets = [0, 1], sizes = [16, 1], strides = [1, 1]} : vector<16x8xf32> to vector<16x1xf32>
      %247 = vector.broadcast %246 : vector<16x1xf32> to vector<16x64xf32>
      %248 = arith.mulf %245, %247 : vector<16x64xf32>
      %cst_118 = arith.constant dense<0.000000e+00> : vector<64xf32>
      %249 = vector.multi_reduction <add>, %248, %cst_118 [0] : vector<16x64xf32> to vector<64xf32>
      %250 = vector.shape_cast %249 : vector<64xf32> to vector<1x64xf32>
      %251 = vector.extract_strided_slice %209 {offsets = [2, 0], sizes = [1, 64], strides = [1, 1]} : vector<8x64xf32> to vector<1x64xf32>
      %252 = vector.broadcast %251 : vector<1x64xf32> to vector<16x64xf32>
      %253 = arith.mulf %252, %178 : vector<16x64xf32>
      %254 = math.exp %253 : vector<16x64xf32>
      %255 = arith.mulf %254, %245 : vector<16x64xf32>
      %256 = vector.extract_strided_slice %215 {offsets = [0, 2], sizes = [16, 1], strides = [1, 1]} : vector<16x8xf32> to vector<16x1xf32>
      %257 = vector.extract_strided_slice %212 {offsets = [2, 0], sizes = [1, 64], strides = [1, 1]} : vector<8x64xf32> to vector<1x64xf32>
      %258 = vector.broadcast %256 : vector<16x1xf32> to vector<16x64xf32>
      %259 = vector.broadcast %257 : vector<1x64xf32> to vector<16x64xf32>
      %260 = arith.mulf %258, %259 : vector<16x64xf32>
      %261 = arith.addf %255, %260 : vector<16x64xf32>
      %262 = vector.extract_strided_slice %218 {offsets = [0, 2], sizes = [16, 1], strides = [1, 1]} : vector<16x8xf32> to vector<16x1xf32>
      %263 = vector.broadcast %262 : vector<16x1xf32> to vector<16x64xf32>
      %264 = arith.mulf %261, %263 : vector<16x64xf32>
      %cst_119 = arith.constant dense<0.000000e+00> : vector<64xf32>
      %265 = vector.multi_reduction <add>, %264, %cst_119 [0] : vector<16x64xf32> to vector<64xf32>
      %266 = vector.shape_cast %265 : vector<64xf32> to vector<1x64xf32>
      %267 = vector.extract_strided_slice %209 {offsets = [3, 0], sizes = [1, 64], strides = [1, 1]} : vector<8x64xf32> to vector<1x64xf32>
      %268 = vector.broadcast %267 : vector<1x64xf32> to vector<16x64xf32>
      %269 = arith.mulf %268, %178 : vector<16x64xf32>
      %270 = math.exp %269 : vector<16x64xf32>
      %271 = arith.mulf %270, %261 : vector<16x64xf32>
      %272 = vector.extract_strided_slice %215 {offsets = [0, 3], sizes = [16, 1], strides = [1, 1]} : vector<16x8xf32> to vector<16x1xf32>
      %273 = vector.extract_strided_slice %212 {offsets = [3, 0], sizes = [1, 64], strides = [1, 1]} : vector<8x64xf32> to vector<1x64xf32>
      %274 = vector.broadcast %272 : vector<16x1xf32> to vector<16x64xf32>
      %275 = vector.broadcast %273 : vector<1x64xf32> to vector<16x64xf32>
      %276 = arith.mulf %274, %275 : vector<16x64xf32>
      %277 = arith.addf %271, %276 : vector<16x64xf32>
      %278 = vector.extract_strided_slice %218 {offsets = [0, 3], sizes = [16, 1], strides = [1, 1]} : vector<16x8xf32> to vector<16x1xf32>
      %279 = vector.broadcast %278 : vector<16x1xf32> to vector<16x64xf32>
      %280 = arith.mulf %277, %279 : vector<16x64xf32>
      %cst_120 = arith.constant dense<0.000000e+00> : vector<64xf32>
      %281 = vector.multi_reduction <add>, %280, %cst_120 [0] : vector<16x64xf32> to vector<64xf32>
      %282 = vector.shape_cast %281 : vector<64xf32> to vector<1x64xf32>
      %283 = vector.extract_strided_slice %209 {offsets = [4, 0], sizes = [1, 64], strides = [1, 1]} : vector<8x64xf32> to vector<1x64xf32>
      %284 = vector.broadcast %283 : vector<1x64xf32> to vector<16x64xf32>
      %285 = arith.mulf %284, %178 : vector<16x64xf32>
      %286 = math.exp %285 : vector<16x64xf32>
      %287 = arith.mulf %286, %277 : vector<16x64xf32>
      %288 = vector.extract_strided_slice %215 {offsets = [0, 4], sizes = [16, 1], strides = [1, 1]} : vector<16x8xf32> to vector<16x1xf32>
      %289 = vector.extract_strided_slice %212 {offsets = [4, 0], sizes = [1, 64], strides = [1, 1]} : vector<8x64xf32> to vector<1x64xf32>
      %290 = vector.broadcast %288 : vector<16x1xf32> to vector<16x64xf32>
      %291 = vector.broadcast %289 : vector<1x64xf32> to vector<16x64xf32>
      %292 = arith.mulf %290, %291 : vector<16x64xf32>
      %293 = arith.addf %287, %292 : vector<16x64xf32>
      %294 = vector.extract_strided_slice %218 {offsets = [0, 4], sizes = [16, 1], strides = [1, 1]} : vector<16x8xf32> to vector<16x1xf32>
      %295 = vector.broadcast %294 : vector<16x1xf32> to vector<16x64xf32>
      %296 = arith.mulf %293, %295 : vector<16x64xf32>
      %cst_121 = arith.constant dense<0.000000e+00> : vector<64xf32>
      %297 = vector.multi_reduction <add>, %296, %cst_121 [0] : vector<16x64xf32> to vector<64xf32>
      %298 = vector.shape_cast %297 : vector<64xf32> to vector<1x64xf32>
      %299 = vector.extract_strided_slice %209 {offsets = [5, 0], sizes = [1, 64], strides = [1, 1]} : vector<8x64xf32> to vector<1x64xf32>
      %300 = vector.broadcast %299 : vector<1x64xf32> to vector<16x64xf32>
      %301 = arith.mulf %300, %178 : vector<16x64xf32>
      %302 = math.exp %301 : vector<16x64xf32>
      %303 = arith.mulf %302, %293 : vector<16x64xf32>
      %304 = vector.extract_strided_slice %215 {offsets = [0, 5], sizes = [16, 1], strides = [1, 1]} : vector<16x8xf32> to vector<16x1xf32>
      %305 = vector.extract_strided_slice %212 {offsets = [5, 0], sizes = [1, 64], strides = [1, 1]} : vector<8x64xf32> to vector<1x64xf32>
      %306 = vector.broadcast %304 : vector<16x1xf32> to vector<16x64xf32>
      %307 = vector.broadcast %305 : vector<1x64xf32> to vector<16x64xf32>
      %308 = arith.mulf %306, %307 : vector<16x64xf32>
      %309 = arith.addf %303, %308 : vector<16x64xf32>
      %310 = vector.extract_strided_slice %218 {offsets = [0, 5], sizes = [16, 1], strides = [1, 1]} : vector<16x8xf32> to vector<16x1xf32>
      %311 = vector.broadcast %310 : vector<16x1xf32> to vector<16x64xf32>
      %312 = arith.mulf %309, %311 : vector<16x64xf32>
      %cst_122 = arith.constant dense<0.000000e+00> : vector<64xf32>
      %313 = vector.multi_reduction <add>, %312, %cst_122 [0] : vector<16x64xf32> to vector<64xf32>
      %314 = vector.shape_cast %313 : vector<64xf32> to vector<1x64xf32>
      %315 = vector.extract_strided_slice %209 {offsets = [6, 0], sizes = [1, 64], strides = [1, 1]} : vector<8x64xf32> to vector<1x64xf32>
      %316 = vector.broadcast %315 : vector<1x64xf32> to vector<16x64xf32>
      %317 = arith.mulf %316, %178 : vector<16x64xf32>
      %318 = math.exp %317 : vector<16x64xf32>
      %319 = arith.mulf %318, %309 : vector<16x64xf32>
      %320 = vector.extract_strided_slice %215 {offsets = [0, 6], sizes = [16, 1], strides = [1, 1]} : vector<16x8xf32> to vector<16x1xf32>
      %321 = vector.extract_strided_slice %212 {offsets = [6, 0], sizes = [1, 64], strides = [1, 1]} : vector<8x64xf32> to vector<1x64xf32>
      %322 = vector.broadcast %320 : vector<16x1xf32> to vector<16x64xf32>
      %323 = vector.broadcast %321 : vector<1x64xf32> to vector<16x64xf32>
      %324 = arith.mulf %322, %323 : vector<16x64xf32>
      %325 = arith.addf %319, %324 : vector<16x64xf32>
      %326 = vector.extract_strided_slice %218 {offsets = [0, 6], sizes = [16, 1], strides = [1, 1]} : vector<16x8xf32> to vector<16x1xf32>
      %327 = vector.broadcast %326 : vector<16x1xf32> to vector<16x64xf32>
      %328 = arith.mulf %325, %327 : vector<16x64xf32>
      %cst_123 = arith.constant dense<0.000000e+00> : vector<64xf32>
      %329 = vector.multi_reduction <add>, %328, %cst_123 [0] : vector<16x64xf32> to vector<64xf32>
      %330 = vector.shape_cast %329 : vector<64xf32> to vector<1x64xf32>
      %331 = vector.extract_strided_slice %209 {offsets = [7, 0], sizes = [1, 64], strides = [1, 1]} : vector<8x64xf32> to vector<1x64xf32>
      %332 = vector.broadcast %331 : vector<1x64xf32> to vector<16x64xf32>
      %333 = arith.mulf %332, %178 : vector<16x64xf32>
      %334 = math.exp %333 : vector<16x64xf32>
      %335 = arith.mulf %334, %325 : vector<16x64xf32>
      %336 = vector.extract_strided_slice %215 {offsets = [0, 7], sizes = [16, 1], strides = [1, 1]} : vector<16x8xf32> to vector<16x1xf32>
      %337 = vector.extract_strided_slice %212 {offsets = [7, 0], sizes = [1, 64], strides = [1, 1]} : vector<8x64xf32> to vector<1x64xf32>
      %338 = vector.broadcast %336 : vector<16x1xf32> to vector<16x64xf32>
      %339 = vector.broadcast %337 : vector<1x64xf32> to vector<16x64xf32>
      %340 = arith.mulf %338, %339 : vector<16x64xf32>
      %341 = arith.addf %335, %340 : vector<16x64xf32>
      %342 = vector.extract_strided_slice %218 {offsets = [0, 7], sizes = [16, 1], strides = [1, 1]} : vector<16x8xf32> to vector<16x1xf32>
      %343 = vector.broadcast %342 : vector<16x1xf32> to vector<16x64xf32>
      %344 = arith.mulf %341, %343 : vector<16x64xf32>
      %cst_124 = arith.constant dense<0.000000e+00> : vector<64xf32>
      %345 = vector.multi_reduction <add>, %344, %cst_124 [0] : vector<16x64xf32> to vector<64xf32>
      %346 = vector.shape_cast %345 : vector<64xf32> to vector<1x64xf32>
      %347 = tpu.concatenate %234, %250, %266, %282, %298, %314, %330, %346 in 0 : vector<1x64xf32>, vector<1x64xf32>, vector<1x64xf32>, vector<1x64xf32>, vector<1x64xf32>, vector<1x64xf32>, vector<1x64xf32>, vector<1x64xf32> -> vector<8x64xf32>
      %348 = arith.index_cast %207 : i32 to index
      %c0_125 = arith.constant 0 : index
      %349 = vector.load %arg23[%348, %c0_125] : memref<32x64xf32, #tpu.memory_space<vmem>>, vector<8x64xf32>
      tpu.vector_store %arg23[%348, %c0_125], %347 {strides = array<i32>} : memref<32x64xf32, #tpu.memory_space<vmem>>, vector<8x64xf32>,
      scf.yield %341 : vector<16x64xf32>
    }
    %c4_i32_90 = arith.constant 4 : i32
    %c0_91 = arith.constant 0 : index
    %c0_92 = arith.constant 0 : index
    %182 = vector.load %arg18[%c0_91, %c0_92] : memref<16x64xf32, #tpu.memory_space<vmem>>, vector<16x64xf32>
    tpu.vector_store %arg18[%c0_91, %c0_92], %181 {strides = array<i32>} : memref<16x64xf32, #tpu.memory_space<vmem>>, vector<16x64xf32>,
    %c0_93 = arith.constant 0 : index
    %c0_94 = arith.constant 0 : index
    %183 = vector.load %arg23[%c0_93, %c0_94] : memref<32x64xf32, #tpu.memory_space<vmem>>, vector<32x64xf32>
    %c0_95 = arith.constant 0 : index
    %c0_96 = arith.constant 0 : index
    %184 = vector.load %arg15[%c0_95, %c0_96] : memref<1x64xf32, #tpu.memory_space<vmem>>, vector<1x64xf32>
    %c0_97 = arith.constant 0 : index
    %c0_98 = arith.constant 0 : index
    %185 = vector.load %arg20[%c0_97, %c0_98] : memref<32x64xf32, #tpu.memory_space<vmem>>, vector<32x64xf32>
    %186 = vector.broadcast %184 : vector<1x64xf32> to vector<32x64xf32>
    %187 = arith.mulf %186, %185 : vector<32x64xf32>
    %188 = arith.addf %183, %187 : vector<32x64xf32>
    %c0_99 = arith.constant 0 : index
    %c0_100 = arith.constant 0 : index
    %189 = vector.load %arg21[%c0_99, %c0_100] : memref<32x64xf32, #tpu.memory_space<vmem>>, vector<32x64xf32>
    %190 = arith.negf %189 : vector<32x64xf32>
    %191 = math.exp %190 : vector<32x64xf32>
    %cst_101 = arith.constant 1.000000e+00 : f32
    %192 = vector.broadcast %cst_101 : f32 to vector<32x64xf32>
    %193 = arith.addf %192, %191 : vector<32x64xf32>
    %194 = arith.divf %192, %193 : vector<32x64xf32>
    %195 = arith.mulf %189, %194 : vector<32x64xf32>
    %196 = arith.mulf %188, %195 : vector<32x64xf32>
    %197 = arith.truncf %196 : vector<32x64xf32> to vector<32x64xbf16>
    %c0_102 = arith.constant 0 : index
    %c0_103 = arith.constant 0 : index
    %198 = vector.load %arg16[%c0_102, %c0_103] : memref<64x32xbf16, #tpu.memory_space<vmem>>, vector<64x32xbf16>
    %cst_104 = arith.constant dense<0.000000e+00> : vector<32x32xf32>
    %199 = tpu.matmul %197, %198, %cst_104 {dimension_numbers = #tpu.dot_dimension_numbers<[1], [0], [0], [1], [0, 0, 1, 1], [], []>} : vector<32x64xbf16>, vector<64x32xbf16>, vector<32x32xf32> -> vector<32x32xf32>
    %c0_105 = arith.constant 0 : index
    %c0_106 = arith.constant 0 : index
    %c0_107 = arith.constant 0 : index
    %200 = vector.load %arg2[%c0_105, %c0_106, %c0_107] : memref<1x32x32xf32, #tpu.memory_space<vmem>>, vector<1x32x32xf32>
    %201 = vector.shape_cast %200 : vector<1x32x32xf32> to vector<32x32xf32>
    %202 = arith.addf %201, %199 : vector<32x32xf32>
    %c0_108 = arith.constant 0 : index
    %c0_109 = arith.constant 0 : index
    %c0_110 = arith.constant 0 : index
    %203 = vector.load %arg17[%c0_108, %c0_109, %c0_110] : memref<1x32x32xf32, #tpu.memory_space<vmem>>, vector<1x32x32xf32>
    %204 = vector.shape_cast %203 : vector<1x32x32xf32> to vector<32x32xf32>
    %205 = vector.shape_cast %202 : vector<32x32xf32> to vector<1x32x32xf32>
    tpu.vector_store %arg17[%c0_108, %c0_109, %c0_110], %205 {strides = array<i32>} : memref<1x32x32xf32, #tpu.memory_space<vmem>>, vector<1x32x32xf32>,
    return
  }
  func.func @transform_0(%arg0: i32, %arg1: i32) -> (i32, i32, i32) {
    %c0_i32 = arith.constant 0 : i32
    %c0_i32_0 = arith.constant 0 : i32
    return %arg0, %arg1, %c0_i32 : i32, i32, i32
  }
  func.func @transform_1(%arg0: i32, %arg1: i32) -> (i32, i32) {
    %c0_i32 = arith.constant 0 : i32
    %c0_i32_0 = arith.constant 0 : i32
    %c0_i32_1 = arith.constant 0 : i32
    return %c0_i32, %c0_i32_0 : i32, i32
  }
  func.func @transform_2(%arg0: i32, %arg1: i32) -> (i32, i32) {
    %c0_i32 = arith.constant 0 : i32
    %c0_i32_0 = arith.constant 0 : i32
    %c0_i32_1 = arith.constant 0 : i32
    return %c0_i32, %c0_i32_0 : i32, i32
  }
  func.func @transform_3(%arg0: i32, %arg1: i32) -> (i32, i32) {
    %c0_i32 = arith.constant 0 : i32
    %c0_i32_0 = arith.constant 0 : i32
    %c0_i32_1 = arith.constant 0 : i32
    return %c0_i32, %c0_i32_0 : i32, i32
  }
  func.func @transform_4(%arg0: i32, %arg1: i32) -> (i32, i32) {
    %c0_i32 = arith.constant 0 : i32
    %c0_i32_0 = arith.constant 0 : i32
    %c0_i32_1 = arith.constant 0 : i32
    return %c0_i32, %c0_i32_0 : i32, i32
  }
  func.func @transform_5(%arg0: i32, %arg1: i32) -> (i32, i32) {
    %c0_i32 = arith.constant 0 : i32
    %c0_i32_0 = arith.constant 0 : i32
    %c0_i32_1 = arith.constant 0 : i32
    return %c0_i32, %c0_i32_0 : i32, i32
  }
  func.func @transform_6(%arg0: i32, %arg1: i32) -> (i32, i32) {
    %c0_i32 = arith.constant 0 : i32
    %c0_i32_0 = arith.constant 0 : i32
    %c0_i32_1 = arith.constant 0 : i32
    return %c0_i32, %c0_i32_0 : i32, i32
  }
  func.func @transform_7(%arg0: i32, %arg1: i32) -> (i32, i32) {
    %c0_i32 = arith.constant 0 : i32
    %c0_i32_0 = arith.constant 0 : i32
    %c0_i32_1 = arith.constant 0 : i32
    return %c0_i32, %c0_i32_0 : i32, i32
  }
  func.func @transform_8(%arg0: i32, %arg1: i32) -> (i32, i32) {
    %c0_i32 = arith.constant 0 : i32
    %c0_i32_0 = arith.constant 0 : i32
    %c0_i32_1 = arith.constant 0 : i32
    return %c0_i32, %c0_i32_0 : i32, i32
  }
  func.func @transform_9(%arg0: i32, %arg1: i32) -> (i32, i32) {
    %c0_i32 = arith.constant 0 : i32
    %c0_i32_0 = arith.constant 0 : i32
    %c0_i32_1 = arith.constant 0 : i32
    return %c0_i32, %c0_i32_0 : i32, i32
  }
  func.func @transform_10(%arg0: i32, %arg1: i32) -> (i32, i32) {
    %c0_i32 = arith.constant 0 : i32
    %c0_i32_0 = arith.constant 0 : i32
    %c0_i32_1 = arith.constant 0 : i32
    return %c0_i32, %c0_i32_0 : i32, i32
  }
  func.func @transform_11(%arg0: i32, %arg1: i32) -> (i32, i32) {
    %c0_i32 = arith.constant 0 : i32
    %c0_i32_0 = arith.constant 0 : i32
    %c0_i32_1 = arith.constant 0 : i32
    return %c0_i32, %c0_i32_0 : i32, i32
  }
  func.func @transform_12(%arg0: i32, %arg1: i32) -> (i32, i32) {
    %c0_i32 = arith.constant 0 : i32
    %c0_i32_0 = arith.constant 0 : i32
    %c0_i32_1 = arith.constant 0 : i32
    return %c0_i32, %c0_i32_0 : i32, i32
  }
  func.func @transform_13(%arg0: i32, %arg1: i32) -> (i32, i32) {
    %c0_i32 = arith.constant 0 : i32
    %c0_i32_0 = arith.constant 0 : i32
    %c0_i32_1 = arith.constant 0 : i32
    return %c0_i32, %c0_i32_0 : i32, i32
  }
  func.func @transform_14(%arg0: i32, %arg1: i32) -> (i32, i32) {
    %c0_i32 = arith.constant 0 : i32
    %c0_i32_0 = arith.constant 0 : i32
    %c0_i32_1 = arith.constant 0 : i32
    return %c0_i32, %c0_i32_0 : i32, i32
  }
  func.func @transform_15(%arg0: i32, %arg1: i32) -> (i32, i32, i32) {
    %c0_i32 = arith.constant 0 : i32
    %c0_i32_0 = arith.constant 0 : i32
    return %arg0, %arg1, %c0_i32 : i32, i32, i32
  }
}

</mosaic_0001>

<llo_original>
// kernel: tpu_custom_call.1
$region0: #{tpu_custom_call.1}
  #allocation0 [shape = 'u32[]', space=smem, size = 0x4, offset = 0x4, fixed_abs, tag = 'smem constant byte address 0x4 - core index']
  #allocation1 [shape = 'u32[144,128]{1,0:T(1,128)}', space=vmem, size = 0x12000, scoped, tag = 'internal scratch']
  #allocation2 [shape = 'f32[16,64]{1,0:T(8,128)}', space=vmem, size = 0x2000, scoped, tag = 'scratch operand']
  #allocation3 [shape = 'f32[40,64]{1,0:T(8,128)}', space=vmem, size = 0x5000, scoped, tag = 'scratch operand']
  #allocation4 [shape = 'f32[32,64]{1,0:T(8,128)}', space=vmem, size = 0x4000, scoped, tag = 'scratch operand']
  #allocation5 [shape = 'f32[32,64]{1,0:T(8,128)}', space=vmem, size = 0x4000, scoped, tag = 'scratch operand']
  #allocation6 [shape = 'f32[32,64]{1,0:T(8,128)}', space=vmem, size = 0x4000, scoped, tag = 'scratch operand']
  #allocation7 [shape = 'f32[32,64]{1,0:T(8,128)}', space=vmem, size = 0x4000, scoped, tag = 'scratch operand']
  #allocation8 [shape = 'f32[4,16,8]{2,1,0:T(8,128)}', space=vmem, size = 0x8000, scoped, tag = 'scratch operand']
  #allocation9 [shape = 'f32[4,16,8]{2,1,0:T(8,128)}', space=vmem, size = 0x8000, scoped, tag = 'scratch operand']
  %s0 = inlined_call_operand.hbm [shape: f32[2,32,32], index: 0, kind: input, shape index: {}, may-alias: {0,15}]
  %s1 = inlined_call_operand.vmem [shape: f32[1,32], index: 1, kind: input, shape index: {}]
  %s2 = inlined_call_operand.vmem [shape: bf16[32,128], index: 2, kind: input, shape index: {}]
  %s3 = inlined_call_operand.vmem [shape: f32[8,64], index: 3, kind: input, shape index: {}]
  %s4 = inlined_call_operand.vmem [shape: f32[1,64], index: 4, kind: input, shape index: {}]
  %s5 = inlined_call_operand.vmem [shape: bf16[64,2], index: 5, kind: input, shape index: {}]
  %s6 = inlined_call_operand.vmem [shape: bf16[32,64], index: 6, kind: input, shape index: {}]
  %s7 = inlined_call_operand.vmem [shape: f32[1,2], index: 7, kind: input, shape index: {}]
  %s8 = inlined_call_operand.vmem [shape: f32[16,1], index: 8, kind: input, shape index: {}]
  %s9 = inlined_call_operand.vmem [shape: f32[16,1], index: 9, kind: input, shape index: {}]
  %s10 = inlined_call_operand.vmem [shape: f32[2,64], index: 10, kind: input, shape index: {}]
  %s11 = inlined_call_operand.vmem [shape: f32[1,64], index: 11, kind: input, shape index: {}]
  %s12 = inlined_call_operand.vmem [shape: f32[16,64], index: 12, kind: input, shape index: {}]
  %s13 = inlined_call_operand.vmem [shape: f32[1,64], index: 13, kind: input, shape index: {}]
  %s14 = inlined_call_operand.vmem [shape: bf16[64,32], index: 14, kind: input, shape index: {}]
  %s15 = inlined_call_operand.hbm [shape: f32[2,32,32], index: 15, kind: output, shape index: {}, may-alias: {0,15}]
  %s16 = sld [smem:[#allocation0]]
  $region108: #{tpu_custom_call.1} parent=0
    _
  %s18 = ssub.s32 1, %s16
  %s19 = scalar_select 0, %s18, %s16
  $region1: #{tpu_custom_call.1} parent=0
    #allocation10 [shape = 'u8[32768]{0}', space=vmem, size = 0x8000, scoped, tag = 'input window, operand 0']
    #allocation11 [shape = 's32[2]{0}', space=sflag, size = 0x8, scoped, tag = 'scoped memory for tpu_custom_call.1']
    #allocation12 [shape = 's32[2]{0}', space=sflag, size = 0x8, scoped, tag = 'scoped memory for tpu_custom_call.1']
    #allocation13 [shape = 'u8[32768]{0}', space=vmem, size = 0x8000, scoped, tag = 'output window, operand 0']
    %20 = vsyncpa [#allocation11], 0
    %s21 = scalar_lea.sflag [#allocation11], 1
    %22 = vsyncpa %s21, 0
    %23 = vsyncpa [#allocation12], 0
    %s24 = scalar_lea.sflag [#allocation12], 1
    %25 = vsyncpa %s24, 0
    loop: start=0, step=1, limit=4
    $region2: #{tpu_custom_call.1} parent=1 // loop_pre_header
      _
    $region3: #{tpu_custom_call.1} parent=1 // loop_header
      %s27 = sphi 0, %s31
      %p28 = scmp.ge.s32.totalorder %s27, 4
      %s34 = sphi 0, %s46
      %s35 = sphi 0, %s42
      %s36 = sphi 0, %s34
      %s37 = sphi 0, %s35
      %s38 = sphi 0, %s36
      %s39 = sphi 0, %s37
      %s51 = sphi 0, %s53
      %s54 = sphi 0, %s51
      %s55 = sphi 0, %s54
      %s71 = sphi 0, %s55
      %s75 = sphi 0, %s75
      %s77 = sphi 0, %s75
      %s78 = sphi 0, %s77
      %s92 = sphi 0, %s78
      %s96 = sphi 0, %s96
      %s98 = sphi 0, %s96
      %s99 = sphi 0, %s98
      %s113 = sphi 0, %s99
      %s117 = sphi 0, %s117
      %s119 = sphi 0, %s117
      %s120 = sphi 0, %s119
      %s134 = sphi 0, %s120
      %s138 = sphi 0, %s138
      %s140 = sphi 0, %s138
      %s141 = sphi 0, %s140
      %s155 = sphi 0, %s141
      %s159 = sphi 0, %s159
      %s161 = sphi 0, %s159
      %s162 = sphi 0, %s161
      %s176 = sphi 0, %s162
      %s180 = sphi 0, %s180
      %s182 = sphi 0, %s180
      %s183 = sphi 0, %s182
      %s197 = sphi 0, %s183
      %s201 = sphi 0, %s201
      %s203 = sphi 0, %s201
      %s204 = sphi 0, %s203
      %s218 = sphi 0, %s204
      %s222 = sphi 0, %s222
      %s224 = sphi 0, %s222
      %s225 = sphi 0, %s224
      %s239 = sphi 0, %s225
      %s243 = sphi 0, %s243
      %s245 = sphi 0, %s243
      %s246 = sphi 0, %s245
      %s260 = sphi 0, %s246
      %s264 = sphi 0, %s264
      %s266 = sphi 0, %s264
      %s267 = sphi 0, %s266
      %s281 = sphi 0, %s267
      %s285 = sphi 0, %s285
      %s287 = sphi 0, %s285
      %s288 = sphi 0, %s287
      %s302 = sphi 0, %s288
      %s306 = sphi 0, %s306
      %s308 = sphi 0, %s306
      %s309 = sphi 0, %s308
      %s323 = sphi 0, %s309
      %s327 = sphi 0, %s327
      %s329 = sphi 0, %s327
      %s330 = sphi 0, %s329
      %s344 = sphi 0, %s330
      %s348 = sphi 0, %s348
      %s350 = sphi 0, %s348
      %s351 = sphi 0, %s350
      %s365 = sphi 0, %s351
      %s373 = sphi 0, %s375
      %s376 = sphi 0, %s373
      %s377 = sphi 0, %s376
      %s393 = sphi 0, %s377
    $region4: #{tpu_custom_call.1} parent=1 // loop_header_branch
      %30 = sbr.rel (%p28) target = $region8
    $region5: #{tpu_custom_call.1} parent=1 // loop_body
      %s32 = ssub.s32 %s27, 1
      %s33 = ssub.s32 %s27, 2
      %s40 = sadd.s32 1, %s35
      %p41 = scmp.ge.s32.totalorder %s40, 1
      %s42 = scalar_select %p41, 0, %s40
      %s43 = sadd.s32 1, %s34
      %s44 = scalar_select %p41, %s43, %s34
      %p45 = scmp.ge.s32.totalorder %s44, 2
      %s46 = scalar_select %p45, 0, %s44
      %s47 = ssub.s32 %s34, %s46
      %s48 = ssub.s32 %s35, %s42
      %s49 = sor.u32 %s47, %s48
      %p50 = scmp.eq.s32.totalorder %s49, 0
      %s52 = sadd.s32 %s51, 1
      %s53 = scalar_select %p50, %s51, %s52
      %p56 = pneg %p50
      %p57 = scmp.eq.s32.totalorder %s27, 1
      %p58 = por %p56, %p57
      %p59 = scmp.ne.s32.totalorder %s51, %s54
      %p60 = scmp.eq.s32.totalorder %s27, 0
      %p61 = por %p59, %p60
      %p62 = scmp.ne.s32.totalorder %s51, %s54
      %p63 = scmp.eq.s32.totalorder %s32, 1
      %p64 = por %p62, %p63
      %p65 = scmp.ne.s32.totalorder %s54, %s55
      %p66 = scmp.eq.s32.totalorder %s32, 0
      %p67 = por %p65, %p66
      %p68 = scmp.ne.s32.totalorder %s54, %s55
      %p69 = scmp.eq.s32.totalorder %s33, 1
      %p70 = por %p68, %p69
      %p72 = scmp.ne.s32.totalorder %s55, %s71
      %p73 = scmp.eq.s32.totalorder %s33, 0
      %p74 = por %p72, %p73
      %s76 = sadd.s32 %s75, 1
      %p79 = scmp.eq.s32.totalorder %s27, 1
      %p80 = scmp.ne.s32.totalorder %s75, %s77
      %p81 = scmp.eq.s32.totalorder %s27, 0
      %p82 = por %p80, %p81
      %p83 = scmp.ne.s32.totalorder %s75, %s77
      %p84 = scmp.eq.s32.totalorder %s32, 1
      %p85 = por %p83, %p84
      %p86 = scmp.ne.s32.totalorder %s77, %s78
      %p87 = scmp.eq.s32.totalorder %s32, 0
      %p88 = por %p86, %p87
      %p89 = scmp.ne.s32.totalorder %s77, %s78
      %p90 = scmp.eq.s32.totalorder %s33, 1
      %p91 = por %p89, %p90
      %p93 = scmp.ne.s32.totalorder %s78, %s92
      %p94 = scmp.eq.s32.totalorder %s33, 0
      %p95 = por %p93, %p94
      %s97 = sadd.s32 %s96, 1
      %p100 = scmp.eq.s32.totalorder %s27, 1
      %p101 = scmp.ne.s32.totalorder %s96, %s98
      %p102 = scmp.eq.s32.totalorder %s27, 0
      %p103 = por %p101, %p102
      %p104 = scmp.ne.s32.totalorder %s96, %s98
      %p105 = scmp.eq.s32.totalorder %s32, 1
      %p106 = por %p104, %p105
      %p107 = scmp.ne.s32.totalorder %s98, %s99
      %p108 = scmp.eq.s32.totalorder %s32, 0
      %p109 = por %p107, %p108
      %p110 = scmp.ne.s32.totalorder %s98, %s99
      %p111 = scmp.eq.s32.totalorder %s33, 1
      %p112 = por %p110, %p111
      %p114 = scmp.ne.s32.totalorder %s99, %s113
      %p115 = scmp.eq.s32.totalorder %s33, 0
      %p116 = por %p114, %p115
      %s118 = sadd.s32 %s117, 1
      %p121 = scmp.eq.s32.totalorder %s27, 1
      %p122 = scmp.ne.s32.totalorder %s117, %s119
      %p123 = scmp.eq.s32.totalorder %s27, 0
      %p124 = por %p122, %p123
      %p125 = scmp.ne.s32.totalorder %s117, %s119
      %p126 = scmp.eq.s32.totalorder %s32, 1
      %p127 = por %p125, %p126
      %p128 = scmp.ne.s32.totalorder %s119, %s120
      %p129 = scmp.eq.s32.totalorder %s32, 0
      %p130 = por %p128, %p129
      %p131 = scmp.ne.s32.totalorder %s119, %s120
      %p132 = scmp.eq.s32.totalorder %s33, 1
      %p133 = por %p131, %p132
      %p135 = scmp.ne.s32.totalorder %s120, %s134
      %p136 = scmp.eq.s32.totalorder %s33, 0
      %p137 = por %p135, %p136
      %s139 = sadd.s32 %s138, 1
      %p142 = scmp.eq.s32.totalorder %s27, 1
      %p143 = scmp.ne.s32.totalorder %s138, %s140
      %p144 = scmp.eq.s32.totalorder %s27, 0
      %p145 = por %p143, %p144
      %p146 = scmp.ne.s32.totalorder %s138, %s140
      %p147 = scmp.eq.s32.totalorder %s32, 1
      %p148 = por %p146, %p147
      %p149 = scmp.ne.s32.totalorder %s140, %s141
      %p150 = scmp.eq.s32.totalorder %s32, 0
      %p151 = por %p149, %p150
      %p152 = scmp.ne.s32.totalorder %s140, %s141
      %p153 = scmp.eq.s32.totalorder %s33, 1
      %p154 = por %p152, %p153
      %p156 = scmp.ne.s32.totalorder %s141, %s155
      %p157 = scmp.eq.s32.totalorder %s33, 0
      %p158 = por %p156, %p157
      %s160 = sadd.s32 %s159, 1
      %p163 = scmp.eq.s32.totalorder %s27, 1
      %p164 = scmp.ne.s32.totalorder %s159, %s161
      %p165 = scmp.eq.s32.totalorder %s27, 0
      %p166 = por %p164, %p165
      %p167 = scmp.ne.s32.totalorder %s159, %s161
      %p168 = scmp.eq.s32.totalorder %s32, 1
      %p169 = por %p167, %p168
      %p170 = scmp.ne.s32.totalorder %s161, %s162
      %p171 = scmp.eq.s32.totalorder %s32, 0
      %p172 = por %p170, %p171
      %p173 = scmp.ne.s32.totalorder %s161, %s162
      %p174 = scmp.eq.s32.totalorder %s33, 1
      %p175 = por %p173, %p174
      %p177 = scmp.ne.s32.totalorder %s162, %s176
      %p178 = scmp.eq.s32.totalorder %s33, 0
      %p179 = por %p177, %p178
      %s181 = sadd.s32 %s180, 1
      %p184 = scmp.eq.s32.totalorder %s27, 1
      %p185 = scmp.ne.s32.totalorder %s180, %s182
      %p186 = scmp.eq.s32.totalorder %s27, 0
      %p187 = por %p185, %p186
      %p188 = scmp.ne.s32.totalorder %s180, %s182
      %p189 = scmp.eq.s32.totalorder %s32, 1
      %p190 = por %p188, %p189
      %p191 = scmp.ne.s32.totalorder %s182, %s183
      %p192 = scmp.eq.s32.totalorder %s32, 0
      %p193 = por %p191, %p192
      %p194 = scmp.ne.s32.totalorder %s182, %s183
      %p195 = scmp.eq.s32.totalorder %s33, 1
      %p196 = por %p194, %p195
      %p198 = scmp.ne.s32.totalorder %s183, %s197
      %p199 = scmp.eq.s32.totalorder %s33, 0
      %p200 = por %p198, %p199
      %s202 = sadd.s32 %s201, 1
      %p205 = scmp.eq.s32.totalorder %s27, 1
      %p206 = scmp.ne.s32.totalorder %s201, %s203
      %p207 = scmp.eq.s32.totalorder %s27, 0
      %p208 = por %p206, %p207
      %p209 = scmp.ne.s32.totalorder %s201, %s203
      %p210 = scmp.eq.s32.totalorder %s32, 1
      %p211 = por %p209, %p210
      %p212 = scmp.ne.s32.totalorder %s203, %s204
      %p213 = scmp.eq.s32.totalorder %s32, 0
      %p214 = por %p212, %p213
      %p215 = scmp.ne.s32.totalorder %s203, %s204
      %p216 = scmp.eq.s32.totalorder %s33, 1
      %p217 = por %p215, %p216
      %p219 = scmp.ne.s32.totalorder %s204, %s218
      %p220 = scmp.eq.s32.totalorder %s33, 0
      %p221 = por %p219, %p220
      %s223 = sadd.s32 %s222, 1
      %p226 = scmp.eq.s32.totalorder %s27, 1
      %p227 = scmp.ne.s32.totalorder %s222, %s224
      %p228 = scmp.eq.s32.totalorder %s27, 0
      %p229 = por %p227, %p228
      %p230 = scmp.ne.s32.totalorder %s222, %s224
      %p231 = scmp.eq.s32.totalorder %s32, 1
      %p232 = por %p230, %p231
      %p233 = scmp.ne.s32.totalorder %s224, %s225
      %p234 = scmp.eq.s32.totalorder %s32, 0
      %p235 = por %p233, %p234
      %p236 = scmp.ne.s32.totalorder %s224, %s225
      %p237 = scmp.eq.s32.totalorder %s33, 1
      %p238 = por %p236, %p237
      %p240 = scmp.ne.s32.totalorder %s225, %s239
      %p241 = scmp.eq.s32.totalorder %s33, 0
      %p242 = por %p240, %p241
      %s244 = sadd.s32 %s243, 1
      %p247 = scmp.eq.s32.totalorder %s27, 1
      %p248 = scmp.ne.s32.totalorder %s243, %s245
      %p249 = scmp.eq.s32.totalorder %s27, 0
      %p250 = por %p248, %p249
      %p251 = scmp.ne.s32.totalorder %s243, %s245
      %p252 = scmp.eq.s32.totalorder %s32, 1
      %p253 = por %p251, %p252
      %p254 = scmp.ne.s32.totalorder %s245, %s246
      %p255 = scmp.eq.s32.totalorder %s32, 0
      %p256 = por %p254, %p255
      %p257 = scmp.ne.s32.totalorder %s245, %s246
      %p258 = scmp.eq.s32.totalorder %s33, 1
      %p259 = por %p257, %p258
      %p261 = scmp.ne.s32.totalorder %s246, %s260
      %p262 = scmp.eq.s32.totalorder %s33, 0
      %p263 = por %p261, %p262
      %s265 = sadd.s32 %s264, 1
      %p268 = scmp.eq.s32.totalorder %s27, 1
      %p269 = scmp.ne.s32.totalorder %s264, %s266
      %p270 = scmp.eq.s32.totalorder %s27, 0
      %p271 = por %p269, %p270
      %p272 = scmp.ne.s32.totalorder %s264, %s266
      %p273 = scmp.eq.s32.totalorder %s32, 1
      %p274 = por %p272, %p273
      %p275 = scmp.ne.s32.totalorder %s266, %s267
      %p276 = scmp.eq.s32.totalorder %s32, 0
      %p277 = por %p275, %p276
      %p278 = scmp.ne.s32.totalorder %s266, %s267
      %p279 = scmp.eq.s32.totalorder %s33, 1
      %p280 = por %p278, %p279
      %p282 = scmp.ne.s32.totalorder %s267, %s281
      %p283 = scmp.eq.s32.totalorder %s33, 0
      %p284 = por %p282, %p283
      %s286 = sadd.s32 %s285, 1
      %p289 = scmp.eq.s32.totalorder %s27, 1
      %p290 = scmp.ne.s32.totalorder %s285, %s287
      %p291 = scmp.eq.s32.totalorder %s27, 0
      %p292 = por %p290, %p291
      %p293 = scmp.ne.s32.totalorder %s285, %s287
      %p294 = scmp.eq.s32.totalorder %s32, 1
      %p295 = por %p293, %p294
      %p296 = scmp.ne.s32.totalorder %s287, %s288
      %p297 = scmp.eq.s32.totalorder %s32, 0
      %p298 = por %p296, %p297
      %p299 = scmp.ne.s32.totalorder %s287, %s288
      %p300 = scmp.eq.s32.totalorder %s33, 1
      %p301 = por %p299, %p300
      %p303 = scmp.ne.s32.totalorder %s288, %s302
      %p304 = scmp.eq.s32.totalorder %s33, 0
      %p305 = por %p303, %p304
      %s307 = sadd.s32 %s306, 1
      %p310 = scmp.eq.s32.totalorder %s27, 1
      %p311 = scmp.ne.s32.totalorder %s306, %s308
      %p312 = scmp.eq.s32.totalorder %s27, 0
      %p313 = por %p311, %p312
      %p314 = scmp.ne.s32.totalorder %s306, %s308
      %p315 = scmp.eq.s32.totalorder %s32, 1
      %p316 = por %p314, %p315
      %p317 = scmp.ne.s32.totalorder %s308, %s309
      %p318 = scmp.eq.s32.totalorder %s32, 0
      %p319 = por %p317, %p318
      %p320 = scmp.ne.s32.totalorder %s308, %s309
      %p321 = scmp.eq.s32.totalorder %s33, 1
      %p322 = por %p320, %p321
      %p324 = scmp.ne.s32.totalorder %s309, %s323
      %p325 = scmp.eq.s32.totalorder %s33, 0
      %p326 = por %p324, %p325
      %s328 = sadd.s32 %s327, 1
      %p331 = scmp.eq.s32.totalorder %s27, 1
      %p332 = scmp.ne.s32.totalorder %s327, %s329
      %p333 = scmp.eq.s32.totalorder %s27, 0
      %p334 = por %p332, %p333
      %p335 = scmp.ne.s32.totalorder %s327, %s329
      %p336 = scmp.eq.s32.totalorder %s32, 1
      %p337 = por %p335, %p336
      %p338 = scmp.ne.s32.totalorder %s329, %s330
      %p339 = scmp.eq.s32.totalorder %s32, 0
      %p340 = por %p338, %p339
      %p341 = scmp.ne.s32.totalorder %s329, %s330
      %p342 = scmp.eq.s32.totalorder %s33, 1
      %p343 = por %p341, %p342
      %p345 = scmp.ne.s32.totalorder %s330, %s344
      %p346 = scmp.eq.s32.totalorder %s33, 0
      %p347 = por %p345, %p346
      %s349 = sadd.s32 %s348, 1
      %p352 = scmp.eq.s32.totalorder %s27, 1
      %p353 = scmp.ne.s32.totalorder %s348, %s350
      %p354 = scmp.eq.s32.totalorder %s27, 0
      %p355 = por %p353, %p354
      %p356 = scmp.ne.s32.totalorder %s348, %s350
      %p357 = scmp.eq.s32.totalorder %s32, 1
      %p358 = por %p356, %p357
      %p359 = scmp.ne.s32.totalorder %s350, %s351
      %p360 = scmp.eq.s32.totalorder %s32, 0
      %p361 = por %p359, %p360
      %p362 = scmp.ne.s32.totalorder %s350, %s351
      %p363 = scmp.eq.s32.totalorder %s33, 1
      %p364 = por %p362, %p363
      %p366 = scmp.ne.s32.totalorder %s351, %s365
      %p367 = scmp.eq.s32.totalorder %s33, 0
      %p368 = por %p366, %p367
      %s369 = ssub.s32 %s34, %s46
      %s370 = ssub.s32 %s35, %s42
      %s371 = sor.u32 %s369, %s370
      %p372 = scmp.eq.s32.totalorder %s371, 0
      %s374 = sadd.s32 %s373, 1
      %s375 = scalar_select %p372, %s373, %s374
      %p378 = pneg %p372
      %p379 = scmp.eq.s32.totalorder %s27, 1
      %p380 = por %p378, %p379
      %p381 = scmp.ne.s32.totalorder %s373, %s376
      %p382 = scmp.eq.s32.totalorder %s27, 0
      %p383 = por %p381, %p382
      %p384 = scmp.ne.s32.totalorder %s373, %s376
      %p385 = scmp.eq.s32.totalorder %s32, 1
      %p386 = por %p384, %p385
      %p387 = scmp.ne.s32.totalorder %s376, %s377
      %p388 = scmp.eq.s32.totalorder %s32, 0
      %p389 = por %p387, %p388
      %p390 = scmp.ne.s32.totalorder %s376, %s377
      %p391 = scmp.eq.s32.totalorder %s33, 1
      %p392 = por %p390, %p391
      %p394 = scmp.ne.s32.totalorder %s377, %s393
      %p395 = scmp.eq.s32.totalorder %s33, 0
      %p396 = por %p394, %p395
      %p397 = scmp.le.s32.totalorder 1, %s27
      %p398 = scmp.lt.s32.totalorder %s27, 3
      %p399 = pnand %p397, %p398
      %p400 = pneg %p399
      // Predicated region
      $region9: #{tpu_custom_call.1} parent=5 // pred_check
        _
      $region10: #{tpu_custom_call.1} parent=5 // pred_check_branch
        %402 = sbr.rel (%p399) target = $region12
      $region11: #{tpu_custom_call.1} parent=5 // pred_region
        %s403 = ssub.s32 %s27, 1
        // Predicated region
        $region13: #{tpu_custom_call.1} parent=11 // pred_check
          %p404 = pneg %p88
        $region14: #{tpu_custom_call.1} parent=11 // pred_check_branch
          %406 = sbr.rel (%p404) target = $region16
        $region15: #{tpu_custom_call.1} parent=11 // pred_region
          _
        $region16: #{tpu_custom_call.1} parent=11 // pred_fallthru
          _
        // Predicated region
        $region17: #{tpu_custom_call.1} parent=11 // pred_check
          %p407 = pneg %p109
        $region18: #{tpu_custom_call.1} parent=11 // pred_check_branch
          %409 = sbr.rel (%p407) target = $region20
        $region19: #{tpu_custom_call.1} parent=11 // pred_region
          _
        $region20: #{tpu_custom_call.1} parent=11 // pred_fallthru
          _
        // Predicated region
        $region21: #{tpu_custom_call.1} parent=11 // pred_check
          %p410 = pneg %p130
        $region22: #{tpu_custom_call.1} parent=11 // pred_check_branch
          %412 = sbr.rel (%p410) target = $region24
        $region23: #{tpu_custom_call.1} parent=11 // pred_region
          _
        $region24: #{tpu_custom_call.1} parent=11 // pred_fallthru
          _
        // Predicated region
        $region25: #{tpu_custom_call.1} parent=11 // pred_check
          %p413 = pneg %p151
        $region26: #{tpu_custom_call.1} parent=11 // pred_check_branch
          %415 = sbr.rel (%p413) target = $region28
        $region27: #{tpu_custom_call.1} parent=11 // pred_region
          _
        $region28: #{tpu_custom_call.1} parent=11 // pred_fallthru
          _
        // Predicated region
        $region29: #{tpu_custom_call.1} parent=11 // pred_check
          %p416 = pneg %p172
        $region30: #{tpu_custom_call.1} parent=11 // pred_check_branch
          %418 = sbr.rel (%p416) target = $region32
        $region31: #{tpu_custom_call.1} parent=11 // pred_region
          _
        $region32: #{tpu_custom_call.1} parent=11 // pred_fallthru
          _
        // Predicated region
        $region33: #{tpu_custom_call.1} parent=11 // pred_check
          %p419 = pneg %p193
        $region34: #{tpu_custom_call.1} parent=11 // pred_check_branch
          %421 = sbr.rel (%p419) target = $region36
        $region35: #{tpu_custom_call.1} parent=11 // pred_region
          _
        $region36: #{tpu_custom_call.1} parent=11 // pred_fallthru
          _
        // Predicated region
        $region37: #{tpu_custom_call.1} parent=11 // pred_check
          %p422 = pneg %p214
        $region38: #{tpu_custom_call.1} parent=11 // pred_check_branch
          %424 = sbr.rel (%p422) target = $region40
        $region39: #{tpu_custom_call.1} parent=11 // pred_region
          _
        $region40: #{tpu_custom_call.1} parent=11 // pred_fallthru
          _
        // Predicated region
        $region41: #{tpu_custom_call.1} parent=11 // pred_check
          %p425 = pneg %p235
        $region42: #{tpu_custom_call.1} parent=11 // pred_check_branch
          %427 = sbr.rel (%p425) target = $region44
        $region43: #{tpu_custom_call.1} parent=11 // pred_region
          _
        $region44: #{tpu_custom_call.1} parent=11 // pred_fallthru
          _
        // Predicated region
        $region45: #{tpu_custom_call.1} parent=11 // pred_check
          %p428 = pneg %p256
        $region46: #{tpu_custom_call.1} parent=11 // pred_check_branch
          %430 = sbr.rel (%p428) target = $region48
        $region47: #{tpu_custom_call.1} parent=11 // pred_region
          _
        $region48: #{tpu_custom_call.1} parent=11 // pred_fallthru
          _
        // Predicated region
        $region49: #{tpu_custom_call.1} parent=11 // pred_check
          %p431 = pneg %p277
        $region50: #{tpu_custom_call.1} parent=11 // pred_check_branch
          %433 = sbr.rel (%p431) target = $region52
        $region51: #{tpu_custom_call.1} parent=11 // pred_region
          _
        $region52: #{tpu_custom_call.1} parent=11 // pred_fallthru
          _
        // Predicated region
        $region53: #{tpu_custom_call.1} parent=11 // pred_check
          %p434 = pneg %p298
        $region54: #{tpu_custom_call.1} parent=11 // pred_check_branch
          %436 = sbr.rel (%p434) target = $region56
        $region55: #{tpu_custom_call.1} parent=11 // pred_region
          _
        $region56: #{tpu_custom_call.1} parent=11 // pred_fallthru
          _
        // Predicated region
        $region57: #{tpu_custom_call.1} parent=11 // pred_check
          %p437 = pneg %p319
        $region58: #{tpu_custom_call.1} parent=11 // pred_check_branch
          %439 = sbr.rel (%p437) target = $region60
        $region59: #{tpu_custom_call.1} parent=11 // pred_region
          _
        $region60: #{tpu_custom_call.1} parent=11 // pred_fallthru
          _
        // Predicated region
        $region61: #{tpu_custom_call.1} parent=11 // pred_check
          %p440 = pneg %p340
        $region62: #{tpu_custom_call.1} parent=11 // pred_check_branch
          %442 = sbr.rel (%p440) target = $region64
        $region63: #{tpu_custom_call.1} parent=11 // pred_region
          _
        $region64: #{tpu_custom_call.1} parent=11 // pred_fallthru
          _
        // Predicated region
        $region65: #{tpu_custom_call.1} parent=11 // pred_check
          %p443 = pneg %p361
        $region66: #{tpu_custom_call.1} parent=11 // pred_check_branch
          %445 = sbr.rel (%p443) target = $region68
        $region67: #{tpu_custom_call.1} parent=11 // pred_region
          _
        $region68: #{tpu_custom_call.1} parent=11 // pred_fallthru
          _
      $region12: #{tpu_custom_call.1} parent=5 // pred_fallthru
        _
      %p446 = scmp.lt.s32.totalorder %s27, 2
      // Predicated region
      $region69: #{tpu_custom_call.1} parent=5 // pred_check
        %p447 = pneg %p446
      $region70: #{tpu_custom_call.1} parent=5 // pred_check_branch
        %449 = sbr.rel (%p447) target = $region72
      $region71: #{tpu_custom_call.1} parent=5 // pred_region
        // Predicated region
        $region73: #{tpu_custom_call.1} parent=71 // pred_check
          %p450 = pneg %p61
        $region74: #{tpu_custom_call.1} parent=71 // pred_check_branch
          %452 = sbr.rel (%p450) target = $region76
        $region75: #{tpu_custom_call.1} parent=71 // pred_region
          %s453 = sand.u32 %s51, 1
          %s454 = scalar_lea.sflag [#allocation11], %s453
          %s455 = sand.u32 %s51, 1
          %s456 = smul.addr %s455, 32
          %s457 = scalar_lea.vmem [#allocation10], %s456
          %s458 = smul.u32 4, %s35
          %s460 = ssub.s32 512, 512
          %461 = vsyncadd %s454, %s460
          %s462 = smul.addr %s34, 4
          %s463 = sadd.s32 %s458, %s462
          %s464 = smul.addr %s463, 128
          %s465 = scalar_lea.hbm %s0, %s464
          %s466 = sshll.u32 %s457, 4
          %s467 = int_to_ptr.vmem [resolvable:$true] %s466
          %472 = dma.hbm_to_vmem [thread:$0]  %s465, 512, %s467, %s454, 128, 128, 8
        $region76: #{tpu_custom_call.1} parent=71 // pred_fallthru
          _
      $region72: #{tpu_custom_call.1} parent=5 // pred_fallthru
        _
      %p473 = scmp.le.s32.totalorder 1, %s27
      %p474 = scmp.lt.s32.totalorder %s27, 3
      %p475 = pnand %p473, %p474
      %p476 = pneg %p475
      // Predicated region
      $region77: #{tpu_custom_call.1} parent=5 // pred_check
        _
      $region78: #{tpu_custom_call.1} parent=5 // pred_check_branch
        %478 = sbr.rel (%p475) target = $region80
      $region79: #{tpu_custom_call.1} parent=5 // pred_region
        %s479 = ssub.s32 %s27, 1
        %s480 = sand.u32 %s54, 1
        %s481 = scalar_lea.sflag [#allocation11], %s480
        %s482 = sand.u32 %s54, 1
        %s483 = smul.addr %s482, 32
        %s484 = scalar_lea.vmem [#allocation10], %s483
        // Predicated region
        $region81: #{tpu_custom_call.1} parent=79 // pred_check
          %p485 = pneg %p67
        $region82: #{tpu_custom_call.1} parent=79 // pred_check_branch
          %487 = sbr.rel (%p485) target = $region84
        $region83: #{tpu_custom_call.1} parent=79 // pred_region
          %488 = dma.done %s481, 512
        $region84: #{tpu_custom_call.1} parent=79 // pred_fallthru
          _
        %s489 = sand.u32 %s54, 1
        %s490 = scalar_lea.sflag [#allocation11], %s489
        %s491 = sand.u32 %s54, 1
        %s492 = smul.addr %s491, 32
        %s493 = scalar_lea.vmem [#allocation10], %s492
        %p494 = pneg %p67
        %p495 = pneg %p64
        %p496 = pneg %p88
        %p497 = pneg %p85
        %p498 = pneg %p109
        %p499 = pneg %p106
        %p500 = pneg %p130
        %p501 = pneg %p127
        %p502 = pneg %p151
        %p503 = pneg %p148
        %p504 = pneg %p172
        %p505 = pneg %p169
        %p506 = pneg %p193
        %p507 = pneg %p190
        %p508 = pneg %p214
        %p509 = pneg %p211
        %p510 = pneg %p235
        %p511 = pneg %p232
        %p512 = pneg %p256
        %p513 = pneg %p253
        %p514 = pneg %p277
        %p515 = pneg %p274
        %p516 = pneg %p298
        %p517 = pneg %p295
        %p518 = pneg %p319
        %p519 = pneg %p316
        %p520 = pneg %p340
        %p521 = pneg %p337
        %p522 = pneg %p361
        %p523 = pneg %p358
        %p524 = pneg %p389
        %p525 = pneg %p386
        %s526 = sand.u32 %s376, 1
        %s527 = scalar_lea.sflag [#allocation12], %s526
        %s528 = sand.u32 %s376, 1
        %s529 = smul.addr %s528, 32
        %s530 = scalar_lea.vmem [#allocation13], %s529
        %s531 = smul.u32 4, %s37
        %s532 = smul.u32 4, %s37
        %p534 = scmp.eq.s32.totalorder %s37, 0
        // Predicated region
        $region85: #{tpu_custom_call.1} parent=79 // pred_check
          %p535 = pneg %p534
        $region86: #{tpu_custom_call.1} parent=79 // pred_check_branch
          %537 = sbr.rel (%p535) target = $region88
        $region87: #{tpu_custom_call.1} parent=79 // pred_region
          %vm538 = vcmask 523264
          %539 = vst.msk [vmem:[#allocation2] sm:$0xff] %vm538, 0.0
          %540 = vst.msk [vmem:[#allocation2 + $0x8] sm:$0xff] %vm538, 0.0
          %541 = vst.msk [vmem:[#allocation3] sm:$0xff] %vm538, 0.0
        $region88: #{tpu_custom_call.1} parent=79 // pred_fallthru
          _
        %v542 = vld [vmem:[%s484] sm:$0xff]
        %v543 = vld [vmem:[%s484 + $0x8] sm:$0xff]
        %v544 = vld [vmem:[%s484 + $0x10] sm:$0xff]
        %v545 = vld [vmem:[%s484 + $0x18] sm:$0xff]
        %v546 = vld [vmem:[%s1] sm:$0x1]
        %v547 = vmul.f32 %v542, %v542
        %v548 = vmul.f32 %v543, %v543
        %v549 = vmul.f32 %v544, %v544
        %v550 = vmul.f32 %v545, %v545
        %vm551 = vcmask 261120
        %v552 = vsel %vm551, %v547, 0.0
        %553 = vadd.xlane.f32.xlu0 %v552
        %v554 = vpop.xlane.xlu0 %553
        %v555 = vsel %vm551, %v548, 0.0
        %556 = vadd.xlane.f32.xlu0 %v555
        %v557 = vpop.xlane.xlu0 %556
        %v558 = vsel %vm551, %v549, 0.0
        %559 = vadd.xlane.f32.xlu0 %v558
        %v560 = vpop.xlane.xlu0 %559
        %v561 = vsel %vm551, %v550, 0.0
        %562 = vadd.xlane.f32.xlu0 %v561
        %v563 = vpop.xlane.xlu0 %562
        %v564 = vrcp.pop 32.0
        %v565 = vmul.f32 %v554, %v564
        %v566 = vmul.f32 %v557, %v564
        %v567 = vmul.f32 %v560, %v564
        %v568 = vmul.f32 %v563, %v564
        %v569 = vadd.f32 %v565, 1e-05
        %v570 = vadd.f32 %v566, 1e-05
        %v571 = vadd.f32 %v567, 1e-05
        %v572 = vadd.f32 %v568, 1e-05
        %v573 = vrsqrt.pop %v569
        %v574 = vrsqrt.pop %v570
        %v575 = vrsqrt.pop %v571
        %v576 = vrsqrt.pop %v572
        %v577 = vmul.f32 %v542, %v573
        %v578 = vmul.f32 %v543, %v574
        %v579 = vmul.f32 %v544, %v575
        %v580 = vmul.f32 %v545, %v576
        %v582 = vlaneseq
        %v583 = vshrl.u32 %v582, 7
        %v584 = vsub.s32 0, %v583
        %v585 = vrot.slane %v546, %v584
        %v587 = vmul.f32 %v577, %v585
        %v588 = vmul.f32 %v578, %v585
        %v589 = vmul.f32 %v579, %v585
        %v590 = vmul.f32 %v580, %v585
        %v591 = vpack.c.bf16 %v588, %v587
        %v592 = vpack.c.bf16 %v590, %v589
        %v593 = vld [vmem:[%s2] sm:$0xf]
        %v594 = vld [vmem:[%s2 + $0x4] sm:$0xf]
        %v595 = vld [vmem:[%s2 + $0x8] sm:$0xf]
        %v596 = vld [vmem:[%s2 + $0xc] sm:$0xf]
        %v601 = vunpack.c.l.b16 %v593
        %v602 = vunpack.c.l.b16 %v594
        %v603 = vunpack.c.l.b16 %v595
        %v604 = vunpack.c.l.b16 %v596
        %v605 = vpack.c.b16 %v602, %v601
        %v606 = vpack.c.b16 %v604, %v603
        %v610 = vsel %vm551, %v591, 0
        %v613 = vsel %vm551, %v592, 0
        %615 = vmatprep.subr.bf16.mxu0 0
        %616 = vmatpush1.bf16.msra.mxu0 %v605
        %617 = vmatprep.subr.bf16.mxu0 0
        %618 = vmatpush1.bf16.msra.mxu0 %v606
        %619 = vmatprep.subr.bf16.mxu0 0
        %620 = vmatpush1.bf16.msra.mxu0 0
        %621 = vmatprep.subr.bf16.mxu0 0
        %622 = vmatpush1.bf16.msra.mxu0 0
        %623 = vmatprep.subr.bf16.mxu0 0
        %624 = vmatpush1.bf16.msra.mxu0 0
        %625 = vmatprep.subr.bf16.mxu0 0
        %626 = vmatpush1.bf16.msra.mxu0 0
        %627 = vmatprep.subr.bf16.mxu0 0
        %628 = vmatpush1.bf16.msra.mxu0 0
        %629 = vmatprep.subr.bf16.mxu0 0
        %630 = vmatpush1.bf16.msra.mxu0 0
        %631 = vmatprep.subr.bf16.mxu0 0
        %632 = vmatpush1.bf16.msra.mxu0 0
        %633 = vmatprep.subr.bf16.mxu0 0
        %634 = vmatpush1.bf16.msra.mxu0 0
        %635 = vmatprep.subr.bf16.mxu0 0
        %636 = vmatpush1.bf16.msra.mxu0 0
        %637 = vmatprep.subr.bf16.mxu0 0
        %638 = vmatpush1.bf16.msra.mxu0 0
        %639 = vmatprep.subr.bf16.mxu0 0
        %640 = vmatpush1.bf16.msra.mxu0 0
        %641 = vmatprep.subr.bf16.mxu0 0
        %642 = vmatpush1.bf16.msra.mxu0 0
        %643 = vmatprep.subr.bf16.mxu0 0
        %644 = vmatpush1.bf16.msra.mxu0 0
        %645 = vmatprep.subr.bf16.mxu0 0
        %646 = vmatpush1.bf16.msra.mxu0 0
        %647 = vmatprep.mubr.bf16.mxu0 0
        %648 = vmatmul.mubr.bf16.gmra.mrb[0].mxu0 %v610
        %v649 = vpop.f32.mrb[0].mxu0
        %v650 = vadd.f32 0.0, %v649
        %v651 = vpop.f32.mrb[0].mxu0
        %v652 = vpop.f32.mrb[0].mxu0
        %v653 = vadd.f32 0.0, %v652
        %v654 = vpop.f32.mrb[0].mxu0
        %655 = vmatprep.mubr.bf16.mxu0 0
        %656 = vmatmul.mubr.bf16.gmra.mrb[0].mxu0 %v613
        %v657 = vpop.f32.mrb[0].mxu0
        %v658 = vadd.f32 0.0, %v657
        %v659 = vpop.f32.mrb[0].mxu0
        %v660 = vpop.f32.mrb[0].mxu0
        %v661 = vadd.f32 0.0, %v660
        %v662 = vpop.f32.mrb[0].mxu0
        %663 = vdwg.mxu0
        %668 = vrot.lane.b32.xlu0 %v650, 64
        %v669 = vpop.permute.xlu0 %668
        %670 = vrot.lane.b32.xlu0 %v653, 64
        %v671 = vpop.permute.xlu0 %670
        %672 = vrot.lane.b32.xlu0 %v658, 64
        %v673 = vpop.permute.xlu0 %672
        %674 = vrot.lane.b32.xlu0 %v661, 64
        %v675 = vpop.permute.xlu0 %674
        %vm680 = vcmask 523264
        %681 = vst.msk [vmem:[#allocation5] sm:$0xff] %vm680, %v669
        %682 = vst.msk [vmem:[#allocation5 + $0x8] sm:$0xff] %vm680, %v671
        %683 = vst.msk [vmem:[#allocation5 + $0x10] sm:$0xff] %vm680, %v673
        %684 = vst.msk [vmem:[#allocation5 + $0x18] sm:$0xff] %vm680, %v675
        %685 = vst.msk [vmem:[#allocation3 + $0x8] sm:$0xff] %vm680, %v650
        %686 = vst.msk [vmem:[#allocation3 + $0x10] sm:$0xff] %vm680, %v653
        %687 = vst.msk [vmem:[#allocation3 + $0x18] sm:$0xff] %vm680, %v658
        %688 = vst.msk [vmem:[#allocation3 + $0x20] sm:$0xff] %vm680, %v661
        %v689 = vld [vmem:[%s3] sm:$0xff]
        %v690 = vld [vmem:[%s4] sm:$0x1]
        %v691 = vld [vmem:[#allocation3 + $0x1] sm:$0xff]
        %v692 = vld [vmem:[#allocation3 + $0x9] sm:$0xff]
        %v693 = vld [vmem:[#allocation3 + $0x11] sm:$0xff]
        %v694 = vld [vmem:[#allocation3 + $0x19] sm:$0xff]
        %v695 = vlaneseq
        %v696 = vshrl.u32 %v695, 7
        %v697 = vsub.s32 0, %v696
        %v698 = vrot.slane %v689, %v697
        %v699 = vmul.f32 %v691, %v698
        %v700 = vmul.f32 %v692, %v698
        %v701 = vmul.f32 %v693, %v698
        %v702 = vmul.f32 %v694, %v698
        %v704 = vlaneseq
        %v705 = vshrl.u32 %v704, 7
        %v706 = vsub.s32 0, %v705
        %v707 = vrot.slane %v690, %v706
        %v709 = vadd.f32 %v707, %v699
        %v710 = vadd.f32 %v707, %v700
        %v711 = vadd.f32 %v707, %v701
        %v712 = vadd.f32 %v707, %v702
        %v713 = vld [vmem:[#allocation3 + $0x2] sm:$0xff]
        %v714 = vld [vmem:[#allocation3 + $0xa] sm:$0xff]
        %v715 = vld [vmem:[#allocation3 + $0x12] sm:$0xff]
        %v716 = vld [vmem:[#allocation3 + $0x1a] sm:$0xff]
        %v717 = vlaneseq
        %v718 = vshrl.u32 %v717, 7
        %v719 = vsub.s32 1, %v718
        %v720 = vrot.slane %v689, %v719
        %v721 = vmul.f32 %v713, %v720
        %v722 = vmul.f32 %v714, %v720
        %v723 = vmul.f32 %v715, %v720
        %v724 = vmul.f32 %v716, %v720
        %v725 = vadd.f32 %v709, %v721
        %v726 = vadd.f32 %v710, %v722
        %v727 = vadd.f32 %v711, %v723
        %v728 = vadd.f32 %v712, %v724
        %v729 = vld [vmem:[#allocation3 + $0x3] sm:$0xff]
        %v730 = vld [vmem:[#allocation3 + $0xb] sm:$0xff]
        %v731 = vld [vmem:[#allocation3 + $0x13] sm:$0xff]
        %v732 = vld [vmem:[#allocation3 + $0x1b] sm:$0xff]
        %v733 = vlaneseq
        %v734 = vshrl.u32 %v733, 7
        %v735 = vsub.s32 2, %v734
        %v736 = vrot.slane %v689, %v735
        %v737 = vmul.f32 %v729, %v736
        %v738 = vmul.f32 %v730, %v736
        %v739 = vmul.f32 %v731, %v736
        %v740 = vmul.f32 %v732, %v736
        %v741 = vadd.f32 %v725, %v737
        %v742 = vadd.f32 %v726, %v738
        %v743 = vadd.f32 %v727, %v739
        %v744 = vadd.f32 %v728, %v740
        %v745 = vld [vmem:[#allocation3 + $0x4] sm:$0xff]
        %v746 = vld [vmem:[#allocation3 + $0xc] sm:$0xff]
        %v747 = vld [vmem:[#allocation3 + $0x14] sm:$0xff]
        %v748 = vld [vmem:[#allocation3 + $0x1c] sm:$0xff]
        %v749 = vlaneseq
        %v750 = vshrl.u32 %v749, 7
        %v751 = vsub.s32 3, %v750
        %v752 = vrot.slane %v689, %v751
        %v753 = vmul.f32 %v745, %v752
        %v754 = vmul.f32 %v746, %v752
        %v755 = vmul.f32 %v747, %v752
        %v756 = vmul.f32 %v748, %v752
        %v757 = vadd.f32 %v741, %v753
        %v758 = vadd.f32 %v742, %v754
        %v759 = vadd.f32 %v743, %v755
        %v760 = vadd.f32 %v744, %v756
        %v761 = vld [vmem:[#allocation3 + $0x5] sm:$0xff]
        %v762 = vld [vmem:[#allocation3 + $0xd] sm:$0xff]
        %v763 = vld [vmem:[#allocation3 + $0x15] sm:$0xff]
        %v764 = vld [vmem:[#allocation3 + $0x1d] sm:$0xff]
        %v765 = vlaneseq
        %v766 = vshrl.u32 %v765, 7
        %v767 = vsub.s32 4, %v766
        %v768 = vrot.slane %v689, %v767
        %v769 = vmul.f32 %v761, %v768
        %v770 = vmul.f32 %v762, %v768
        %v771 = vmul.f32 %v763, %v768
        %v772 = vmul.f32 %v764, %v768
        %v773 = vadd.f32 %v757, %v769
        %v774 = vadd.f32 %v758, %v770
        %v775 = vadd.f32 %v759, %v771
        %v776 = vadd.f32 %v760, %v772
        %v777 = vld [vmem:[#allocation3 + $0x6] sm:$0xff]
        %v778 = vld [vmem:[#allocation3 + $0xe] sm:$0xff]
        %v779 = vld [vmem:[#allocation3 + $0x16] sm:$0xff]
        %v780 = vld [vmem:[#allocation3 + $0x1e] sm:$0xff]
        %v781 = vlaneseq
        %v782 = vshrl.u32 %v781, 7
        %v783 = vsub.s32 5, %v782
        %v784 = vrot.slane %v689, %v783
        %v785 = vmul.f32 %v777, %v784
        %v786 = vmul.f32 %v778, %v784
        %v787 = vmul.f32 %v779, %v784
        %v788 = vmul.f32 %v780, %v784
        %v789 = vadd.f32 %v773, %v785
        %v790 = vadd.f32 %v774, %v786
        %v791 = vadd.f32 %v775, %v787
        %v792 = vadd.f32 %v776, %v788
        %v793 = vld [vmem:[#allocation3 + $0x7] sm:$0xff]
        %v794 = vld [vmem:[#allocation3 + $0xf] sm:$0xff]
        %v795 = vld [vmem:[#allocation3 + $0x17] sm:$0xff]
        %v796 = vld [vmem:[#allocation3 + $0x1f] sm:$0xff]
        %v797 = vlaneseq
        %v798 = vshrl.u32 %v797, 7
        %v799 = vsub.s32 6, %v798
        %v800 = vrot.slane %v689, %v799
        %v801 = vmul.f32 %v793, %v800
        %v802 = vmul.f32 %v794, %v800
        %v803 = vmul.f32 %v795, %v800
        %v804 = vmul.f32 %v796, %v800
        %v805 = vadd.f32 %v789, %v801
        %v806 = vadd.f32 %v790, %v802
        %v807 = vadd.f32 %v791, %v803
        %v808 = vadd.f32 %v792, %v804
        %v809 = vld [vmem:[#allocation3 + $0x8] sm:$0xff]
        %v810 = vld [vmem:[#allocation3 + $0x10] sm:$0xff]
        %v811 = vld [vmem:[#allocation3 + $0x18] sm:$0xff]
        %v812 = vld [vmem:[#allocation3 + $0x20] sm:$0xff]
        %v813 = vlaneseq
        %v814 = vshrl.u32 %v813, 7
        %v815 = vsub.s32 7, %v814
        %v816 = vrot.slane %v689, %v815
        %v817 = vmul.f32 %v809, %v816
        %v818 = vmul.f32 %v810, %v816
        %v819 = vmul.f32 %v811, %v816
        %v820 = vmul.f32 %v812, %v816
        %v821 = vadd.f32 %v805, %v817
        %v822 = vadd.f32 %v806, %v818
        %v823 = vadd.f32 %v807, %v819
        %v824 = vadd.f32 %v808, %v820
        %v825 = vld [vmem:[#allocation3 + $0x21] sm:$0x7f]
        %vm826 = vcmask 522240
        %827 = vst.msk [vmem:[#allocation3 + $0x1] sm:$0x7f] %vm826, %v825
        %v828 = vxor.u32 %v821, 2147483648
        %v829 = vxor.u32 %v822, 2147483648
        %v830 = vxor.u32 %v823, 2147483648
        %v831 = vxor.u32 %v824, 2147483648
        %v832 = vmul.f32 %v828, 1.442695
        %v833 = vpow.pop %v832
        %v834 = vmul.f32 %v829, 1.442695
        %v835 = vpow.pop %v834
        %v836 = vmul.f32 %v830, 1.442695
        %v837 = vpow.pop %v836
        %v838 = vmul.f32 %v831, 1.442695
        %v839 = vpow.pop %v838
        %v840 = vadd.f32 %v833, 1.0
        %v841 = vadd.f32 %v835, 1.0
        %v842 = vadd.f32 %v837, 1.0
        %v843 = vadd.f32 %v839, 1.0
        %v844 = vrcp.pop %v840
        %v845 = vmul.f32 1.0, %v844
        %v846 = vrcp.pop %v841
        %v847 = vmul.f32 1.0, %v846
        %v848 = vrcp.pop %v842
        %v849 = vmul.f32 1.0, %v848
        %v850 = vrcp.pop %v843
        %v851 = vmul.f32 1.0, %v850
        %v852 = vmul.f32 %v821, %v845
        %v853 = vmul.f32 %v822, %v847
        %v854 = vmul.f32 %v823, %v849
        %v855 = vmul.f32 %v824, %v851
        %856 = vst.msk [vmem:[#allocation4] sm:$0xff] %vm680, %v852
        %857 = vst.msk [vmem:[#allocation4 + $0x8] sm:$0xff] %vm680, %v853
        %858 = vst.msk [vmem:[#allocation4 + $0x10] sm:$0xff] %vm680, %v854
        %859 = vst.msk [vmem:[#allocation4 + $0x18] sm:$0xff] %vm680, %v855
        %v860 = vpack.c.bf16 %v853, %v852
        %v861 = vpack.c.bf16 %v855, %v854
        %v862 = vld [vmem:[%s5] sm:$0xf]
        %v863 = vld [vmem:[%s5 + $0x4] sm:$0xf]
        %v864 = vld [vmem:[%s5 + $0x8] sm:$0xf]
        %v865 = vld [vmem:[%s5 + $0xc] sm:$0xf]
        %v866 = vld [vmem:[%s5 + $0x10] sm:$0xf]
        %v867 = vld [vmem:[%s5 + $0x14] sm:$0xf]
        %v868 = vld [vmem:[%s5 + $0x18] sm:$0xf]
        %v869 = vld [vmem:[%s5 + $0x1c] sm:$0xf]
        %v878 = vunpack.c.l.b16 %v862
        %v879 = vunpack.c.l.b16 %v863
        %v880 = vunpack.c.l.b16 %v864
        %v881 = vunpack.c.l.b16 %v865
        %v882 = vunpack.c.l.b16 %v866
        %v883 = vunpack.c.l.b16 %v867
        %v884 = vunpack.c.l.b16 %v868
        %v885 = vunpack.c.l.b16 %v869
        %v886 = vpack.c.b16 %v879, %v878
        %v887 = vpack.c.b16 %v881, %v880
        %v888 = vpack.c.b16 %v883, %v882
        %v889 = vpack.c.b16 %v885, %v884
        %v895 = vsel %vm680, %v860, 0
        %v898 = vsel %vm680, %v861, 0
        %900 = vmatprep.subr.bf16.mxu0 0
        %901 = vmatpush1.bf16.msra.mxu0 %v886
        %902 = vmatprep.subr.bf16.mxu0 0
        %903 = vmatpush1.bf16.msra.mxu0 %v887
        %904 = vmatprep.subr.bf16.mxu0 0
        %905 = vmatpush1.bf16.msra.mxu0 %v888
        %906 = vmatprep.subr.bf16.mxu0 0
        %907 = vmatpush1.bf16.msra.mxu0 %v889
        %908 = vmatprep.subr.bf16.mxu0 0
        %909 = vmatpush1.bf16.msra.mxu0 0
        %910 = vmatprep.subr.bf16.mxu0 0
        %911 = vmatpush1.bf16.msra.mxu0 0
        %912 = vmatprep.subr.bf16.mxu0 0
        %913 = vmatpush1.bf16.msra.mxu0 0
        %914 = vmatprep.subr.bf16.mxu0 0
        %915 = vmatpush1.bf16.msra.mxu0 0
        %916 = vmatprep.subr.bf16.mxu0 0
        %917 = vmatpush1.bf16.msra.mxu0 0
        %918 = vmatprep.subr.bf16.mxu0 0
        %919 = vmatpush1.bf16.msra.mxu0 0
        %920 = vmatprep.subr.bf16.mxu0 0
        %921 = vmatpush1.bf16.msra.mxu0 0
        %922 = vmatprep.subr.bf16.mxu0 0
        %923 = vmatpush1.bf16.msra.mxu0 0
        %924 = vmatprep.subr.bf16.mxu0 0
        %925 = vmatpush1.bf16.msra.mxu0 0
        %926 = vmatprep.subr.bf16.mxu0 0
        %927 = vmatpush1.bf16.msra.mxu0 0
        %928 = vmatprep.subr.bf16.mxu0 0
        %929 = vmatpush1.bf16.msra.mxu0 0
        %930 = vmatprep.subr.bf16.mxu0 0
        %931 = vmatpush1.bf16.msra.mxu0 0
        %932 = vmatprep.mubr.bf16.mxu0 0
        %933 = vmatmul.mubr.bf16.gmra.mrb[0].mxu0 %v895
        %v934 = vpop.f32.mrb[0].mxu0
        %v935 = vadd.f32 0.0, %v934
        %v936 = vpop.f32.mrb[0].mxu0
        %v937 = vpop.f32.mrb[0].mxu0
        %v938 = vadd.f32 0.0, %v937
        %v939 = vpop.f32.mrb[0].mxu0
        %940 = vmatprep.mubr.bf16.mxu0 0
        %941 = vmatmul.mubr.bf16.gmra.mrb[0].mxu0 %v898
        %v942 = vpop.f32.mrb[0].mxu0
        %v943 = vadd.f32 0.0, %v942
        %v944 = vpop.f32.mrb[0].mxu0
        %v945 = vpop.f32.mrb[0].mxu0
        %v946 = vadd.f32 0.0, %v945
        %v947 = vpop.f32.mrb[0].mxu0
        %948 = vdwg.mxu0
        %v949 = vld [vmem:[%s7] sm:$0x1]
        %v950 = vmul.f32 %v935, %v935
        %v951 = vmul.f32 %v938, %v938
        %v952 = vmul.f32 %v943, %v943
        %v953 = vmul.f32 %v946, %v946
        %vm954 = vcmask 15360
        %v955 = vsel %vm954, %v950, 0.0
        %956 = vadd.xlane.f32.xlu0 %v955
        %v957 = vpop.xlane.xlu0 %956
        %v958 = vsel %vm954, %v951, 0.0
        %959 = vadd.xlane.f32.xlu0 %v958
        %v960 = vpop.xlane.xlu0 %959
        %v961 = vsel %vm954, %v952, 0.0
        %962 = vadd.xlane.f32.xlu0 %v961
        %v963 = vpop.xlane.xlu0 %962
        %v964 = vsel %vm954, %v953, 0.0
        %965 = vadd.xlane.f32.xlu0 %v964
        %v966 = vpop.xlane.xlu0 %965
        %v967 = vrcp.pop 2.0
        %v968 = vmul.f32 %v957, %v967
        %v969 = vmul.f32 %v960, %v967
        %v970 = vmul.f32 %v963, %v967
        %v971 = vmul.f32 %v966, %v967
        %v972 = vadd.f32 %v968, 1e-05
        %v973 = vadd.f32 %v969, 1e-05
        %v974 = vadd.f32 %v970, 1e-05
        %v975 = vadd.f32 %v971, 1e-05
        %v976 = vrsqrt.pop %v972
        %v977 = vrsqrt.pop %v973
        %v978 = vrsqrt.pop %v974
        %v979 = vrsqrt.pop %v975
        %v980 = vmul.f32 %v935, %v976
        %v981 = vmul.f32 %v938, %v977
        %v982 = vmul.f32 %v943, %v978
        %v983 = vmul.f32 %v946, %v979
        %v985 = vlaneseq
        %v986 = vshrl.u32 %v985, 7
        %v987 = vsub.s32 0, %v986
        %v988 = vrot.slane %v949, %v987
        %v990 = vmul.f32 %v980, %v988
        %v991 = vmul.f32 %v981, %v988
        %v992 = vmul.f32 %v982, %v988
        %v993 = vmul.f32 %v983, %v988
        %v994 = vld [vmem:[%s10] sm:$0x3]
        %996 = vset.pattern.permute.xlu0 0
        %997 = vperm.xlu0 %996, %v990
        %v998 = vpop.permute.xlu0 %997
        %1001 = vset.pattern.permute.xlu0 0
        %1002 = vperm.xlu0 %1001, %v991
        %v1003 = vpop.permute.xlu0 %1002
        %1006 = vset.pattern.permute.xlu0 0
        %1007 = vperm.xlu0 %1006, %v992
        %v1008 = vpop.permute.xlu0 %1007
        %1011 = vset.pattern.permute.xlu0 0
        %1012 = vperm.xlu0 %1011, %v993
        %v1013 = vpop.permute.xlu0 %1012
        %v1015 = vlaneseq
        %v1016 = vshrl.u32 %v1015, 7
        %v1017 = vsub.s32 0, %v1016
        %v1018 = vrot.slane %v994, %v1017
        %v1019 = vmul.f32 %v998, %v1018
        %v1020 = vmul.f32 %v1003, %v1018
        %v1021 = vmul.f32 %v1008, %v1018
        %v1022 = vmul.f32 %v1013, %v1018
        %1023 = vset.pattern.permute.xlu0 1
        %1024 = vperm.xlu0 %1023, %v990
        %v1025 = vpop.permute.xlu0 %1024
        %1027 = vset.pattern.permute.xlu0 1
        %1028 = vperm.xlu0 %1027, %v991
        %v1029 = vpop.permute.xlu0 %1028
        %1031 = vset.pattern.permute.xlu0 1
        %1032 = vperm.xlu0 %1031, %v992
        %v1033 = vpop.permute.xlu0 %1032
        %1035 = vset.pattern.permute.xlu0 1
        %1036 = vperm.xlu0 %1035, %v993
        %v1037 = vpop.permute.xlu0 %1036
        %v1039 = vlaneseq
        %v1040 = vshrl.u32 %v1039, 7
        %v1041 = vsub.s32 1, %v1040
        %v1042 = vrot.slane %v994, %v1041
        %v1043 = vmul.f32 %v1025, %v1042
        %v1044 = vmul.f32 %v1029, %v1042
        %v1045 = vmul.f32 %v1033, %v1042
        %v1046 = vmul.f32 %v1037, %v1042
        %v1047 = vadd.f32 %v1019, %v1043
        %v1048 = vadd.f32 %v1020, %v1044
        %v1049 = vadd.f32 %v1021, %v1045
        %v1050 = vadd.f32 %v1022, %v1046
        %v1051 = vld [vmem:[%s11] sm:$0x1]
        %v1053 = vlaneseq
        %v1054 = vshrl.u32 %v1053, 7
        %v1055 = vsub.s32 0, %v1054
        %v1056 = vrot.slane %v1051, %v1055
        %v1058 = vadd.f32 %v1047, %v1056
        %v1059 = vadd.f32 %v1048, %v1056
        %v1060 = vadd.f32 %v1049, %v1056
        %v1061 = vadd.f32 %v1050, %v1056
        %vm1062 = vcmp.gt.f32.partialorder %v1058, 20.0
        %vm1063 = vcmp.gt.f32.partialorder %v1059, 20.0
        %vm1064 = vcmp.gt.f32.partialorder %v1060, 20.0
        %vm1065 = vcmp.gt.f32.partialorder %v1061, 20.0
        %v1066 = vmin.f32 %v1058, 20.0
        %v1067 = vmin.f32 %v1059, 20.0
        %v1068 = vmin.f32 %v1060, 20.0
        %v1069 = vmin.f32 %v1061, 20.0
        %v1070 = vmul.f32 %v1066, 1.442695
        %v1071 = vpow.pop %v1070
        %v1072 = vmul.f32 %v1067, 1.442695
        %v1073 = vpow.pop %v1072
        %v1074 = vmul.f32 %v1068, 1.442695
        %v1075 = vpow.pop %v1074
        %v1076 = vmul.f32 %v1069, 1.442695
        %v1077 = vpow.pop %v1076
        %v1078 = vadd.f32 %v1071, 1.0
        %v1079 = vlog2.pop %v1078
        %v1080 = vmul.f32 %v1079, 0.6931472
        %v1081 = vmul.f32 -0.5, %v1071
        %v1082 = vadd.f32 %v1081, 1.0
        %v1083 = vmul.f32 %v1082, %v1071
        %v1084 = vand.u32 2147483647, %v1071
        %vm1085 = vcmp.lt.f32.partialorder %v1084, 0.0004427343
        %v1086 = vsel %vm1085, %v1083, %v1080
        %v1087 = vadd.f32 %v1073, 1.0
        %v1088 = vlog2.pop %v1087
        %v1089 = vmul.f32 %v1088, 0.6931472
        %v1090 = vmul.f32 -0.5, %v1073
        %v1091 = vadd.f32 %v1090, 1.0
        %v1092 = vmul.f32 %v1091, %v1073
        %v1093 = vand.u32 2147483647, %v1073
        %vm1094 = vcmp.lt.f32.partialorder %v1093, 0.0004427343
        %v1095 = vsel %vm1094, %v1092, %v1089
        %v1096 = vadd.f32 %v1075, 1.0
        %v1097 = vlog2.pop %v1096
        %v1098 = vmul.f32 %v1097, 0.6931472
        %v1099 = vmul.f32 -0.5, %v1075
        %v1100 = vadd.f32 %v1099, 1.0
        %v1101 = vmul.f32 %v1100, %v1075
        %v1102 = vand.u32 2147483647, %v1075
        %vm1103 = vcmp.lt.f32.partialorder %v1102, 0.0004427343
        %v1104 = vsel %vm1103, %v1101, %v1098
        %v1105 = vadd.f32 %v1077, 1.0
        %v1106 = vlog2.pop %v1105
        %v1107 = vmul.f32 %v1106, 0.6931472
        %v1108 = vmul.f32 -0.5, %v1077
        %v1109 = vadd.f32 %v1108, 1.0
        %v1110 = vmul.f32 %v1109, %v1077
        %v1111 = vand.u32 2147483647, %v1077
        %vm1112 = vcmp.lt.f32.partialorder %v1111, 0.0004427343
        %v1113 = vsel %vm1112, %v1110, %v1107
        %v1114 = vsel %vm1062, %v1058, %v1086
        %v1115 = vsel %vm1063, %v1059, %v1095
        %v1116 = vsel %vm1064, %v1060, %v1104
        %v1117 = vsel %vm1065, %v1061, %v1113
        %1118 = vst.msk [vmem:[#allocation6] sm:$0xff] %vm680, %v1114
        %1119 = vst.msk [vmem:[#allocation6 + $0x8] sm:$0xff] %vm680, %v1115
        %1120 = vst.msk [vmem:[#allocation6 + $0x10] sm:$0xff] %vm680, %v1116
        %1121 = vst.msk [vmem:[#allocation6 + $0x18] sm:$0xff] %vm680, %v1117
        %v1122 = vld [vmem:[%s6] sm:$0xf]
        %v1123 = vld [vmem:[%s6 + $0x4] sm:$0xf]
        %v1124 = vld [vmem:[%s6 + $0x8] sm:$0xf]
        %v1125 = vld [vmem:[%s6 + $0xc] sm:$0xf]
        %v1130 = vunpack.c.l.b16 %v1122
        %v1131 = vunpack.c.l.b16 %v1123
        %v1132 = vunpack.c.l.b16 %v1124
        %v1133 = vunpack.c.l.b16 %v1125
        %v1134 = vpack.c.b16 %v1131, %v1130
        %v1135 = vpack.c.b16 %v1133, %v1132
        %v1137 = vsel %vm680, %v1134, 0
        %v1140 = vsel %vm680, %v1135, 0
        %1142 = vmatprep.subr.bf16.mxu0 0
        %1143 = vmatpush1.bf16.xpose.msra.mxu0 %v895
        %1144 = vmatprep.subr.bf16.mxu0 0
        %1145 = vmatpush1.bf16.xpose.msra.mxu0 %v898
        %1146 = vmatprep.subr.bf16.mxu0 0
        %1147 = vmatpush1.bf16.xpose.msra.mxu0 0
        %1148 = vmatprep.subr.bf16.mxu0 0
        %1149 = vmatpush1.bf16.xpose.msra.mxu0 0
        %1150 = vmatprep.subr.bf16.mxu0 0
        %1151 = vmatpush1.bf16.xpose.msra.mxu0 0
        %1152 = vmatprep.subr.bf16.mxu0 0
        %1153 = vmatpush1.bf16.xpose.msra.mxu0 0
        %1154 = vmatprep.subr.bf16.mxu0 0
        %1155 = vmatpush1.bf16.xpose.msra.mxu0 0
        %1156 = vmatprep.subr.bf16.mxu0 0
        %1157 = vmatpush1.bf16.xpose.msra.mxu0 0
        %1158 = vmatprep.subr.bf16.mxu0 0
        %1159 = vmatpush1.bf16.xpose.msra.mxu0 0
        %1160 = vmatprep.subr.bf16.mxu0 0
        %1161 = vmatpush1.bf16.xpose.msra.mxu0 0
        %1162 = vmatprep.subr.bf16.mxu0 0
        %1163 = vmatpush1.bf16.xpose.msra.mxu0 0
        %1164 = vmatprep.subr.bf16.mxu0 0
        %1165 = vmatpush1.bf16.xpose.msra.mxu0 0
        %1166 = vmatprep.subr.bf16.mxu0 0
        %1167 = vmatpush1.bf16.xpose.msra.mxu0 0
        %1168 = vmatprep.subr.bf16.mxu0 0
        %1169 = vmatpush1.bf16.xpose.msra.mxu0 0
        %1170 = vmatprep.subr.bf16.mxu0 0
        %1171 = vmatpush1.bf16.xpose.msra.mxu0 0
        %1172 = vmatprep.subr.bf16.mxu0 0
        %1173 = vmatpush1.bf16.xpose.msra.mxu0 0
        %1174 = vmatprep.mubr.bf16.mxu0 0
        %1175 = vmatmul.mubr.bf16.gmra.mrb[0].mxu0 %v1137
        %v1176 = vpop.f32.mrb[0].mxu0
        %v1177 = vadd.f32 0.0, %v1176
        %v1178 = vpop.f32.mrb[0].mxu0
        %v1179 = vpop.f32.mrb[0].mxu0
        %v1180 = vadd.f32 0.0, %v1179
        %v1181 = vpop.f32.mrb[0].mxu0
        %1182 = vmatprep.mubr.bf16.mxu0 0
        %1183 = vmatmul.mubr.bf16.gmra.mrb[0].mxu0 %v1140
        %v1184 = vpop.f32.mrb[0].mxu0
        %v1185 = vadd.f32 0.0, %v1184
        %v1186 = vpop.f32.mrb[0].mxu0
        %v1187 = vpop.f32.mrb[0].mxu0
        %v1188 = vadd.f32 0.0, %v1187
        %v1189 = vpop.f32.mrb[0].mxu0
        %1190 = vdwg.mxu0
        %v1191 = vmul.f32 %v1177, %v1177
        %v1192 = vmul.f32 %v1180, %v1180
        %v1193 = vsel %vm551, %v1191, 0.0
        %v1194 = vsel %vm551, %v1192, 0.0
        %v1195 = vadd.f32 %v1193, %v1194
        %v1196 = vrot.slane %v1195, 4
        %v1197 = vadd.f32 %v1195, %v1196
        %v1198 = vrot.slane %v1197, 2
        %v1199 = vadd.f32 %v1197, %v1198
        %v1200 = vrot.slane %v1199, 1
        %v1201 = vadd.f32 %v1199, %v1200
        %v1202 = vrcp.pop 16.0
        %v1203 = vmul.f32 %v1201, %v1202
        %v1204 = vadd.f32 %v1203, 1e-05
        %v1205 = vrsqrt.pop %v1204
        %v1206 = vmul.f32 %v1177, %v1205
        %v1207 = vmul.f32 %v1180, %v1205
        %v1208 = vld [vmem:[%s8] sm:$0xff]
        %v1209 = vld [vmem:[%s8 + $0x8] sm:$0xff]
        %1211 = vset.pattern.permute.xlu0 0
        %1212 = vperm.xlu0 %1211, %v1208
        %v1213 = vpop.permute.xlu0 %1212
        %1216 = vset.pattern.permute.xlu0 0
        %1217 = vperm.xlu0 %1216, %v1209
        %v1218 = vpop.permute.xlu0 %1217
        %v1220 = vmul.f32 %v1206, %v1213
        %v1221 = vmul.f32 %v1207, %v1218
        %v1222 = vmul.f32 %v1185, %v1185
        %v1223 = vmul.f32 %v1188, %v1188
        %v1224 = vsel %vm551, %v1222, 0.0
        %v1225 = vsel %vm551, %v1223, 0.0
        %v1226 = vadd.f32 %v1224, %v1225
        %v1227 = vrot.slane %v1226, 4
        %v1228 = vadd.f32 %v1226, %v1227
        %v1229 = vrot.slane %v1228, 2
        %v1230 = vadd.f32 %v1228, %v1229
        %v1231 = vrot.slane %v1230, 1
        %v1232 = vadd.f32 %v1230, %v1231
        %v1233 = vmul.f32 %v1232, %v1202
        %v1234 = vadd.f32 %v1233, 1e-05
        %v1235 = vrsqrt.pop %v1234
        %v1236 = vmul.f32 %v1185, %v1235
        %v1237 = vmul.f32 %v1188, %v1235
        %v1238 = vld [vmem:[%s9] sm:$0xff]
        %v1239 = vld [vmem:[%s9 + $0x8] sm:$0xff]
        %1241 = vset.pattern.permute.xlu0 0
        %1242 = vperm.xlu0 %1241, %v1238
        %v1243 = vpop.permute.xlu0 %1242
        %1246 = vset.pattern.permute.xlu0 0
        %1247 = vperm.xlu0 %1246, %v1239
        %v1248 = vpop.permute.xlu0 %1247
        %v1250 = vmul.f32 %v1236, %v1243
        %v1251 = vmul.f32 %v1237, %v1248
        %vm1252 = vcmask 64512
        %1253 = vst.msk [vmem:[#allocation8] sm:$0xff] %vm1252, %v1220
        %1254 = vst.msk [vmem:[#allocation8 + $0x8] sm:$0xff] %vm1252, %v1221
        %1255 = vst.msk [vmem:[#allocation9] sm:$0xff] %vm1252, %v1250
        %1256 = vst.msk [vmem:[#allocation9 + $0x8] sm:$0xff] %vm1252, %v1251
        %1259 = vrot.lane.b32.xlu0 %v1220, 120
        %v1260 = vpop.permute.xlu0 %1259
        %1261 = vrot.lane.b32.xlu0 %v1221, 120
        %v1262 = vpop.permute.xlu0 %1261
        %s1265 = scalar_lea.vmem [#allocation8], 16
        %1266 = vst.msk [vmem:[%s1265] sm:$0xff] %vm1252, %v1260
        %1267 = vst.msk [vmem:[%s1265 + $0x8] sm:$0xff] %vm1252, %v1262
        %1270 = vrot.lane.b32.xlu0 %v1250, 120
        %v1271 = vpop.permute.xlu0 %1270
        %1272 = vrot.lane.b32.xlu0 %v1251, 120
        %v1273 = vpop.permute.xlu0 %1272
        %s1276 = scalar_lea.vmem [#allocation9], 16
        %1277 = vst.msk [vmem:[%s1276] sm:$0xff] %vm1252, %v1271
        %1278 = vst.msk [vmem:[%s1276 + $0x8] sm:$0xff] %vm1252, %v1273
        %1279 = vrot.lane.b32.xlu0 %v1220, 112
        %v1280 = vpop.permute.xlu0 %1279
        %1281 = vrot.lane.b32.xlu0 %v1221, 112
        %v1282 = vpop.permute.xlu0 %1281
        %s1285 = scalar_lea.vmem [#allocation8], 32
        %1286 = vst.msk [vmem:[%s1285] sm:$0xff] %vm1252, %v1280
        %1287 = vst.msk [vmem:[%s1285 + $0x8] sm:$0xff] %vm1252, %v1282
        %1288 = vrot.lane.b32.xlu0 %v1250, 112
        %v1289 = vpop.permute.xlu0 %1288
        %1290 = vrot.lane.b32.xlu0 %v1251, 112
        %v1291 = vpop.permute.xlu0 %1290
        %s1294 = scalar_lea.vmem [#allocation9], 32
        %1295 = vst.msk [vmem:[%s1294] sm:$0xff] %vm1252, %v1289
        %1296 = vst.msk [vmem:[%s1294 + $0x8] sm:$0xff] %vm1252, %v1291
        %1297 = vrot.lane.b32.xlu0 %v1220, 104
        %v1298 = vpop.permute.xlu0 %1297
        %1299 = vrot.lane.b32.xlu0 %v1221, 104
        %v1300 = vpop.permute.xlu0 %1299
        %s1303 = scalar_lea.vmem [#allocation8], 48
        %1304 = vst.msk [vmem:[%s1303] sm:$0xff] %vm1252, %v1298
        %1305 = vst.msk [vmem:[%s1303 + $0x8] sm:$0xff] %vm1252, %v1300
        %1306 = vrot.lane.b32.xlu0 %v1250, 104
        %v1307 = vpop.permute.xlu0 %1306
        %1308 = vrot.lane.b32.xlu0 %v1251, 104
        %v1309 = vpop.permute.xlu0 %1308
        %s1312 = scalar_lea.vmem [#allocation9], 48
        %1313 = vst.msk [vmem:[%s1312] sm:$0xff] %vm1252, %v1307
        %1314 = vst.msk [vmem:[%s1312 + $0x8] sm:$0xff] %vm1252, %v1309
        %v1315 = vld [vmem:[%s12] sm:$0xff]
        %v1316 = vld [vmem:[%s12 + $0x8] sm:$0xff]
        %v1317 = vld [vmem:[#allocation2] sm:$0xff]
        %v1318 = vld [vmem:[#allocation2 + $0x8] sm:$0xff]
        loop: start=0, step=1, limit=4
        $region89: #{tpu_custom_call.1} parent=79 // loop_pre_header
          _
        $region90: #{tpu_custom_call.1} parent=79 // loop_header
          %s1320 = sphi 0, %s1324
          %p1321 = scmp.ge.s32.totalorder %s1320, 4
          %v1325 = vphi %v1317, %v1699
          %v1326 = vphi %v1318, %v1700
        $region91: #{tpu_custom_call.1} parent=79 // loop_header_branch
          %1323 = sbr.rel (%p1321) target = $region95
        $region92: #{tpu_custom_call.1} parent=79 // loop_body
          %s1327 = smul.u32 %s1320, 8
          %s1328 = scalar_lea.vmem [#allocation6], %s1327
          %v1329 = vld [vmem:[%s1328] sm:$0xff]
          %s1330 = scalar_lea.vmem [#allocation4], %s1327
          %v1331 = vld [vmem:[%s1330] sm:$0xff]
          %v1332 = vmul.f32 %v1329, %v1331
          %s1333 = smul.u32 %s1320, 16
          %s1334 = scalar_lea.vmem [#allocation8], %s1333
          %v1335 = vld [vmem:[%s1334] sm:$0xff]
          %v1336 = vld [vmem:[%s1334 + $0x8] sm:$0xff]
          %s1337 = scalar_lea.vmem [#allocation9], %s1333
          %v1338 = vld [vmem:[%s1337] sm:$0xff]
          %v1339 = vld [vmem:[%s1337 + $0x8] sm:$0xff]
          %v1340 = vlaneseq
          %v1341 = vshrl.u32 %v1340, 7
          %v1342 = vsub.s32 0, %v1341
          %v1343 = vrot.slane %v1329, %v1342
          %v1344 = vmul.f32 %v1343, %v1315
          %v1345 = vmul.f32 %v1343, %v1316
          %v1346 = vmul.f32 %v1344, 1.442695
          %v1347 = vpow.pop %v1346
          %v1348 = vmul.f32 %v1345, 1.442695
          %v1349 = vpow.pop %v1348
          %v1350 = vmul.f32 %v1347, %v1325
          %v1351 = vmul.f32 %v1349, %v1326
          %1353 = vset.pattern.permute.xlu0 0
          %1354 = vperm.xlu0 %1353, %v1335
          %v1355 = vpop.permute.xlu0 %1354
          %1358 = vset.pattern.permute.xlu0 0
          %1359 = vperm.xlu0 %1358, %v1336
          %v1360 = vpop.permute.xlu0 %1359
          %v1362 = vlaneseq
          %v1363 = vshrl.u32 %v1362, 7
          %v1364 = vsub.s32 0, %v1363
          %v1365 = vrot.slane %v1332, %v1364
          %v1366 = vmul.f32 %v1355, %v1365
          %v1367 = vmul.f32 %v1360, %v1365
          %v1368 = vadd.f32 %v1350, %v1366
          %v1369 = vadd.f32 %v1351, %v1367
          %1371 = vset.pattern.permute.xlu0 0
          %1372 = vperm.xlu0 %1371, %v1338
          %v1373 = vpop.permute.xlu0 %1372
          %1376 = vset.pattern.permute.xlu0 0
          %1377 = vperm.xlu0 %1376, %v1339
          %v1378 = vpop.permute.xlu0 %1377
          %v1380 = vmul.f32 %v1368, %v1373
          %v1381 = vmul.f32 %v1369, %v1378
          %v1382 = vsel %vm680, %v1380, 0.0
          %v1383 = vsel %vm680, %v1381, 0.0
          %v1384 = vadd.f32 %v1382, %v1383
          %v1385 = vrot.slane %v1384, 4
          %v1386 = vadd.f32 %v1384, %v1385
          %v1387 = vrot.slane %v1386, 2
          %v1388 = vadd.f32 %v1386, %v1387
          %v1389 = vrot.slane %v1388, 1
          %v1390 = vadd.f32 %v1388, %v1389
          %v1391 = vlaneseq
          %v1392 = vshrl.u32 %v1391, 7
          %v1393 = vsub.s32 1, %v1392
          %v1394 = vrot.slane %v1329, %v1393
          %v1395 = vmul.f32 %v1394, %v1315
          %v1396 = vmul.f32 %v1394, %v1316
          %v1397 = vmul.f32 %v1395, 1.442695
          %v1398 = vpow.pop %v1397
          %v1399 = vmul.f32 %v1396, 1.442695
          %v1400 = vpow.pop %v1399
          %v1401 = vmul.f32 %v1398, %v1368
          %v1402 = vmul.f32 %v1400, %v1369
          %1403 = vset.pattern.permute.xlu0 1
          %1404 = vperm.xlu0 %1403, %v1335
          %v1405 = vpop.permute.xlu0 %1404
          %1407 = vset.pattern.permute.xlu0 1
          %1408 = vperm.xlu0 %1407, %v1336
          %v1409 = vpop.permute.xlu0 %1408
          %v1411 = vlaneseq
          %v1412 = vshrl.u32 %v1411, 7
          %v1413 = vsub.s32 1, %v1412
          %v1414 = vrot.slane %v1332, %v1413
          %v1415 = vmul.f32 %v1405, %v1414
          %v1416 = vmul.f32 %v1409, %v1414
          %v1417 = vadd.f32 %v1401, %v1415
          %v1418 = vadd.f32 %v1402, %v1416
          %1419 = vset.pattern.permute.xlu0 1
          %1420 = vperm.xlu0 %1419, %v1338
          %v1421 = vpop.permute.xlu0 %1420
          %1423 = vset.pattern.permute.xlu0 1
          %1424 = vperm.xlu0 %1423, %v1339
          %v1425 = vpop.permute.xlu0 %1424
          %v1427 = vmul.f32 %v1417, %v1421
          %v1428 = vmul.f32 %v1418, %v1425
          %v1429 = vsel %vm680, %v1427, 0.0
          %v1430 = vsel %vm680, %v1428, 0.0
          %v1431 = vadd.f32 %v1429, %v1430
          %v1432 = vrot.slane %v1431, 4
          %v1433 = vadd.f32 %v1431, %v1432
          %v1434 = vrot.slane %v1433, 2
          %v1435 = vadd.f32 %v1433, %v1434
          %v1436 = vrot.slane %v1435, 1
          %v1437 = vadd.f32 %v1435, %v1436
          %v1438 = vlaneseq
          %v1439 = vshrl.u32 %v1438, 7
          %v1440 = vsub.s32 2, %v1439
          %v1441 = vrot.slane %v1329, %v1440
          %v1442 = vmul.f32 %v1441, %v1315
          %v1443 = vmul.f32 %v1441, %v1316
          %v1444 = vmul.f32 %v1442, 1.442695
          %v1445 = vpow.pop %v1444
          %v1446 = vmul.f32 %v1443, 1.442695
          %v1447 = vpow.pop %v1446
          %v1448 = vmul.f32 %v1445, %v1417
          %v1449 = vmul.f32 %v1447, %v1418
          %1450 = vset.pattern.permute.xlu0 2
          %1451 = vperm.xlu0 %1450, %v1335
          %v1452 = vpop.permute.xlu0 %1451
          %1454 = vset.pattern.permute.xlu0 2
          %1455 = vperm.xlu0 %1454, %v1336
          %v1456 = vpop.permute.xlu0 %1455
          %v1458 = vlaneseq
          %v1459 = vshrl.u32 %v1458, 7
          %v1460 = vsub.s32 2, %v1459
          %v1461 = vrot.slane %v1332, %v1460
          %v1462 = vmul.f32 %v1452, %v1461
          %v1463 = vmul.f32 %v1456, %v1461
          %v1464 = vadd.f32 %v1448, %v1462
          %v1465 = vadd.f32 %v1449, %v1463
          %1466 = vset.pattern.permute.xlu0 2
          %1467 = vperm.xlu0 %1466, %v1338
          %v1468 = vpop.permute.xlu0 %1467
          %1470 = vset.pattern.permute.xlu0 2
          %1471 = vperm.xlu0 %1470, %v1339
          %v1472 = vpop.permute.xlu0 %1471
          %v1474 = vmul.f32 %v1464, %v1468
          %v1475 = vmul.f32 %v1465, %v1472
          %v1476 = vsel %vm680, %v1474, 0.0
          %v1477 = vsel %vm680, %v1475, 0.0
          %v1478 = vadd.f32 %v1476, %v1477
          %v1479 = vrot.slane %v1478, 4
          %v1480 = vadd.f32 %v1478, %v1479
          %v1481 = vrot.slane %v1480, 2
          %v1482 = vadd.f32 %v1480, %v1481
          %v1483 = vrot.slane %v1482, 1
          %v1484 = vadd.f32 %v1482, %v1483
          %v1485 = vlaneseq
          %v1486 = vshrl.u32 %v1485, 7
          %v1487 = vsub.s32 3, %v1486
          %v1488 = vrot.slane %v1329, %v1487
          %v1489 = vmul.f32 %v1488, %v1315
          %v1490 = vmul.f32 %v1488, %v1316
          %v1491 = vmul.f32 %v1489, 1.442695
          %v1492 = vpow.pop %v1491
          %v1493 = vmul.f32 %v1490, 1.442695
          %v1494 = vpow.pop %v1493
          %v1495 = vmul.f32 %v1492, %v1464
          %v1496 = vmul.f32 %v1494, %v1465
          %1497 = vset.pattern.permute.xlu0 3
          %1498 = vperm.xlu0 %1497, %v1335
          %v1499 = vpop.permute.xlu0 %1498
          %1501 = vset.pattern.permute.xlu0 3
          %1502 = vperm.xlu0 %1501, %v1336
          %v1503 = vpop.permute.xlu0 %1502
          %v1505 = vlaneseq
          %v1506 = vshrl.u32 %v1505, 7
          %v1507 = vsub.s32 3, %v1506
          %v1508 = vrot.slane %v1332, %v1507
          %v1509 = vmul.f32 %v1499, %v1508
          %v1510 = vmul.f32 %v1503, %v1508
          %v1511 = vadd.f32 %v1495, %v1509
          %v1512 = vadd.f32 %v1496, %v1510
          %1513 = vset.pattern.permute.xlu0 3
          %1514 = vperm.xlu0 %1513, %v1338
          %v1515 = vpop.permute.xlu0 %1514
          %1517 = vset.pattern.permute.xlu0 3
          %1518 = vperm.xlu0 %1517, %v1339
          %v1519 = vpop.permute.xlu0 %1518
          %v1521 = vmul.f32 %v1511, %v1515
          %v1522 = vmul.f32 %v1512, %v1519
          %v1523 = vsel %vm680, %v1521, 0.0
          %v1524 = vsel %vm680, %v1522, 0.0
          %v1525 = vadd.f32 %v1523, %v1524
          %v1526 = vrot.slane %v1525, 4
          %v1527 = vadd.f32 %v1525, %v1526
          %v1528 = vrot.slane %v1527, 2
          %v1529 = vadd.f32 %v1527, %v1528
          %v1530 = vrot.slane %v1529, 1
          %v1531 = vadd.f32 %v1529, %v1530
          %v1532 = vlaneseq
          %v1533 = vshrl.u32 %v1532, 7
          %v1534 = vsub.s32 4, %v1533
          %v1535 = vrot.slane %v1329, %v1534
          %v1536 = vmul.f32 %v1535, %v1315
          %v1537 = vmul.f32 %v1535, %v1316
          %v1538 = vmul.f32 %v1536, 1.442695
          %v1539 = vpow.pop %v1538
          %v1540 = vmul.f32 %v1537, 1.442695
          %v1541 = vpow.pop %v1540
          %v1542 = vmul.f32 %v1539, %v1511
          %v1543 = vmul.f32 %v1541, %v1512
          %1544 = vset.pattern.permute.xlu0 4
          %1545 = vperm.xlu0 %1544, %v1335
          %v1546 = vpop.permute.xlu0 %1545
          %1548 = vset.pattern.permute.xlu0 4
          %1549 = vperm.xlu0 %1548, %v1336
          %v1550 = vpop.permute.xlu0 %1549
          %v1552 = vlaneseq
          %v1553 = vshrl.u32 %v1552, 7
          %v1554 = vsub.s32 4, %v1553
          %v1555 = vrot.slane %v1332, %v1554
          %v1556 = vmul.f32 %v1546, %v1555
          %v1557 = vmul.f32 %v1550, %v1555
          %v1558 = vadd.f32 %v1542, %v1556
          %v1559 = vadd.f32 %v1543, %v1557
          %1560 = vset.pattern.permute.xlu0 4
          %1561 = vperm.xlu0 %1560, %v1338
          %v1562 = vpop.permute.xlu0 %1561
          %1564 = vset.pattern.permute.xlu0 4
          %1565 = vperm.xlu0 %1564, %v1339
          %v1566 = vpop.permute.xlu0 %1565
          %v1568 = vmul.f32 %v1558, %v1562
          %v1569 = vmul.f32 %v1559, %v1566
          %v1570 = vsel %vm680, %v1568, 0.0
          %v1571 = vsel %vm680, %v1569, 0.0
          %v1572 = vadd.f32 %v1570, %v1571
          %v1573 = vrot.slane %v1572, 4
          %v1574 = vadd.f32 %v1572, %v1573
          %v1575 = vrot.slane %v1574, 2
          %v1576 = vadd.f32 %v1574, %v1575
          %v1577 = vrot.slane %v1576, 1
          %v1578 = vadd.f32 %v1576, %v1577
          %v1579 = vlaneseq
          %v1580 = vshrl.u32 %v1579, 7
          %v1581 = vsub.s32 5, %v1580
          %v1582 = vrot.slane %v1329, %v1581
          %v1583 = vmul.f32 %v1582, %v1315
          %v1584 = vmul.f32 %v1582, %v1316
          %v1585 = vmul.f32 %v1583, 1.442695
          %v1586 = vpow.pop %v1585
          %v1587 = vmul.f32 %v1584, 1.442695
          %v1588 = vpow.pop %v1587
          %v1589 = vmul.f32 %v1586, %v1558
          %v1590 = vmul.f32 %v1588, %v1559
          %1591 = vset.pattern.permute.xlu0 5
          %1592 = vperm.xlu0 %1591, %v1335
          %v1593 = vpop.permute.xlu0 %1592
          %1595 = vset.pattern.permute.xlu0 5
          %1596 = vperm.xlu0 %1595, %v1336
          %v1597 = vpop.permute.xlu0 %1596
          %v1599 = vlaneseq
          %v1600 = vshrl.u32 %v1599, 7
          %v1601 = vsub.s32 5, %v1600
          %v1602 = vrot.slane %v1332, %v1601
          %v1603 = vmul.f32 %v1593, %v1602
          %v1604 = vmul.f32 %v1597, %v1602
          %v1605 = vadd.f32 %v1589, %v1603
          %v1606 = vadd.f32 %v1590, %v1604
          %1607 = vset.pattern.permute.xlu0 5
          %1608 = vperm.xlu0 %1607, %v1338
          %v1609 = vpop.permute.xlu0 %1608
          %1611 = vset.pattern.permute.xlu0 5
          %1612 = vperm.xlu0 %1611, %v1339
          %v1613 = vpop.permute.xlu0 %1612
          %v1615 = vmul.f32 %v1605, %v1609
          %v1616 = vmul.f32 %v1606, %v1613
          %v1617 = vsel %vm680, %v1615, 0.0
          %v1618 = vsel %vm680, %v1616, 0.0
          %v1619 = vadd.f32 %v1617, %v1618
          %v1620 = vrot.slane %v1619, 4
          %v1621 = vadd.f32 %v1619, %v1620
          %v1622 = vrot.slane %v1621, 2
          %v1623 = vadd.f32 %v1621, %v1622
          %v1624 = vrot.slane %v1623, 1
          %v1625 = vadd.f32 %v1623, %v1624
          %v1626 = vlaneseq
          %v1627 = vshrl.u32 %v1626, 7
          %v1628 = vsub.s32 6, %v1627
          %v1629 = vrot.slane %v1329, %v1628
          %v1630 = vmul.f32 %v1629, %v1315
          %v1631 = vmul.f32 %v1629, %v1316
          %v1632 = vmul.f32 %v1630, 1.442695
          %v1633 = vpow.pop %v1632
          %v1634 = vmul.f32 %v1631, 1.442695
          %v1635 = vpow.pop %v1634
          %v1636 = vmul.f32 %v1633, %v1605
          %v1637 = vmul.f32 %v1635, %v1606
          %1638 = vset.pattern.permute.xlu0 6
          %1639 = vperm.xlu0 %1638, %v1335
          %v1640 = vpop.permute.xlu0 %1639
          %1642 = vset.pattern.permute.xlu0 6
          %1643 = vperm.xlu0 %1642, %v1336
          %v1644 = vpop.permute.xlu0 %1643
          %v1646 = vlaneseq
          %v1647 = vshrl.u32 %v1646, 7
          %v1648 = vsub.s32 6, %v1647
          %v1649 = vrot.slane %v1332, %v1648
          %v1650 = vmul.f32 %v1640, %v1649
          %v1651 = vmul.f32 %v1644, %v1649
          %v1652 = vadd.f32 %v1636, %v1650
          %v1653 = vadd.f32 %v1637, %v1651
          %1654 = vset.pattern.permute.xlu0 6
          %1655 = vperm.xlu0 %1654, %v1338
          %v1656 = vpop.permute.xlu0 %1655
          %1658 = vset.pattern.permute.xlu0 6
          %1659 = vperm.xlu0 %1658, %v1339
          %v1660 = vpop.permute.xlu0 %1659
          %v1662 = vmul.f32 %v1652, %v1656
          %v1663 = vmul.f32 %v1653, %v1660
          %v1664 = vsel %vm680, %v1662, 0.0
          %v1665 = vsel %vm680, %v1663, 0.0
          %v1666 = vadd.f32 %v1664, %v1665
          %v1667 = vrot.slane %v1666, 4
          %v1668 = vadd.f32 %v1666, %v1667
          %v1669 = vrot.slane %v1668, 2
          %v1670 = vadd.f32 %v1668, %v1669
          %v1671 = vrot.slane %v1670, 1
          %v1672 = vadd.f32 %v1670, %v1671
          %v1673 = vlaneseq
          %v1674 = vshrl.u32 %v1673, 7
          %v1675 = vsub.s32 7, %v1674
          %v1676 = vrot.slane %v1329, %v1675
          %v1677 = vmul.f32 %v1676, %v1315
          %v1678 = vmul.f32 %v1676, %v1316
          %v1679 = vmul.f32 %v1677, 1.442695
          %v1680 = vpow.pop %v1679
          %v1681 = vmul.f32 %v1678, 1.442695
          %v1682 = vpow.pop %v1681
          %v1683 = vmul.f32 %v1680, %v1652
          %v1684 = vmul.f32 %v1682, %v1653
          %1685 = vset.pattern.permute.xlu0 7
          %1686 = vperm.xlu0 %1685, %v1335
          %v1687 = vpop.permute.xlu0 %1686
          %1689 = vset.pattern.permute.xlu0 7
          %1690 = vperm.xlu0 %1689, %v1336
          %v1691 = vpop.permute.xlu0 %1690
          %v1693 = vlaneseq
          %v1694 = vshrl.u32 %v1693, 7
          %v1695 = vsub.s32 7, %v1694
          %v1696 = vrot.slane %v1332, %v1695
          %v1697 = vmul.f32 %v1687, %v1696
          %v1698 = vmul.f32 %v1691, %v1696
          %v1699 = vadd.f32 %v1683, %v1697
          %v1700 = vadd.f32 %v1684, %v1698
          %1701 = vset.pattern.permute.xlu0 7
          %1702 = vperm.xlu0 %1701, %v1338
          %v1703 = vpop.permute.xlu0 %1702
          %1705 = vset.pattern.permute.xlu0 7
          %1706 = vperm.xlu0 %1705, %v1339
          %v1707 = vpop.permute.xlu0 %1706
          %v1709 = vmul.f32 %v1699, %v1703
          %v1710 = vmul.f32 %v1700, %v1707
          %v1711 = vsel %vm680, %v1709, 0.0
          %v1712 = vsel %vm680, %v1710, 0.0
          %v1713 = vadd.f32 %v1711, %v1712
          %v1714 = vrot.slane %v1713, 4
          %v1715 = vadd.f32 %v1713, %v1714
          %v1716 = vrot.slane %v1715, 2
          %v1717 = vadd.f32 %v1715, %v1716
          %v1718 = vrot.slane %v1717, 1
          %v1719 = vadd.f32 %v1717, %v1718
          %vm1720 = vcmask 1040384
          %v1721 = vsel %vm1720, %v1390, %v1437
          %vm1722 = vcmask 1041408
          %v1723 = vsel %vm1722, %v1721, %v1484
          %vm1724 = vcmask 1042432
          %v1725 = vsel %vm1724, %v1723, %v1531
          %vm1726 = vcmask 1043456
          %v1727 = vsel %vm1726, %v1725, %v1578
          %vm1728 = vcmask 1044480
          %v1729 = vsel %vm1728, %v1727, %v1625
          %vm1730 = vcmask 1045504
          %v1731 = vsel %vm1730, %v1729, %v1672
          %vm1732 = vcmask 1046528
          %v1733 = vsel %vm1732, %v1731, %v1719
          %s1734 = scalar_lea.vmem [#allocation7], %s1327
          %1735 = vst.msk [vmem:[%s1734] sm:$0xff] %vm680, %v1733
        $region93: #{tpu_custom_call.1} parent=79 // loop_footer
          %s1324 = sadd.s32 1, %s1320
        $region94: #{tpu_custom_call.1} parent=79 // loop_footer_branch
          %1319 = sbr.rel target = $region90
        $region95: #{tpu_custom_call.1} parent=79 // loop_exit
          _
        %1736 = vst.msk [vmem:[#allocation2] sm:$0xff] %vm680, %v1325
        %1737 = vst.msk [vmem:[#allocation2 + $0x8] sm:$0xff] %vm680, %v1326
        %v1738 = vld [vmem:[#allocation7] sm:$0xff]
        %v1739 = vld [vmem:[#allocation7 + $0x8] sm:$0xff]
        %v1740 = vld [vmem:[#allocation7 + $0x10] sm:$0xff]
        %v1741 = vld [vmem:[#allocation7 + $0x18] sm:$0xff]
        %v1742 = vld [vmem:[%s13] sm:$0x1]
        %v1743 = vld [vmem:[#allocation4] sm:$0xff]
        %v1744 = vld [vmem:[#allocation4 + $0x8] sm:$0xff]
        %v1745 = vld [vmem:[#allocation4 + $0x10] sm:$0xff]
        %v1746 = vld [vmem:[#allocation4 + $0x18] sm:$0xff]
        %v1748 = vlaneseq
        %v1749 = vshrl.u32 %v1748, 7
        %v1750 = vsub.s32 0, %v1749
        %v1751 = vrot.slane %v1742, %v1750
        %v1753 = vmul.f32 %v1751, %v1743
        %v1754 = vmul.f32 %v1751, %v1744
        %v1755 = vmul.f32 %v1751, %v1745
        %v1756 = vmul.f32 %v1751, %v1746
        %v1757 = vadd.f32 %v1738, %v1753
        %v1758 = vadd.f32 %v1739, %v1754
        %v1759 = vadd.f32 %v1740, %v1755
        %v1760 = vadd.f32 %v1741, %v1756
        %v1761 = vld [vmem:[#allocation5] sm:$0xff]
        %v1762 = vld [vmem:[#allocation5 + $0x8] sm:$0xff]
        %v1763 = vld [vmem:[#allocation5 + $0x10] sm:$0xff]
        %v1764 = vld [vmem:[#allocation5 + $0x18] sm:$0xff]
        %v1765 = vxor.u32 %v1761, 2147483648
        %v1766 = vxor.u32 %v1762, 2147483648
        %v1767 = vxor.u32 %v1763, 2147483648
        %v1768 = vxor.u32 %v1764, 2147483648
        %v1769 = vmul.f32 %v1765, 1.442695
        %v1770 = vpow.pop %v1769
        %v1771 = vmul.f32 %v1766, 1.442695
        %v1772 = vpow.pop %v1771
        %v1773 = vmul.f32 %v1767, 1.442695
        %v1774 = vpow.pop %v1773
        %v1775 = vmul.f32 %v1768, 1.442695
        %v1776 = vpow.pop %v1775
        %v1777 = vadd.f32 %v1770, 1.0
        %v1778 = vadd.f32 %v1772, 1.0
        %v1779 = vadd.f32 %v1774, 1.0
        %v1780 = vadd.f32 %v1776, 1.0
        %v1781 = vrcp.pop %v1777
        %v1782 = vmul.f32 1.0, %v1781
        %v1783 = vrcp.pop %v1778
        %v1784 = vmul.f32 1.0, %v1783
        %v1785 = vrcp.pop %v1779
        %v1786 = vmul.f32 1.0, %v1785
        %v1787 = vrcp.pop %v1780
        %v1788 = vmul.f32 1.0, %v1787
        %v1789 = vmul.f32 %v1761, %v1782
        %v1790 = vmul.f32 %v1762, %v1784
        %v1791 = vmul.f32 %v1763, %v1786
        %v1792 = vmul.f32 %v1764, %v1788
        %v1793 = vmul.f32 %v1757, %v1789
        %v1794 = vmul.f32 %v1758, %v1790
        %v1795 = vmul.f32 %v1759, %v1791
        %v1796 = vmul.f32 %v1760, %v1792
        %v1797 = vpack.c.bf16 %v1794, %v1793
        %v1798 = vpack.c.bf16 %v1796, %v1795
        %v1799 = vld [vmem:[%s14] sm:$0xf]
        %v1800 = vld [vmem:[%s14 + $0x4] sm:$0xf]
        %v1801 = vld [vmem:[%s14 + $0x8] sm:$0xf]
        %v1802 = vld [vmem:[%s14 + $0xc] sm:$0xf]
        %v1803 = vld [vmem:[%s14 + $0x10] sm:$0xf]
        %v1804 = vld [vmem:[%s14 + $0x14] sm:$0xf]
        %v1805 = vld [vmem:[%s14 + $0x18] sm:$0xf]
        %v1806 = vld [vmem:[%s14 + $0x1c] sm:$0xf]
        %v1815 = vunpack.c.l.b16 %v1799
        %v1816 = vunpack.c.l.b16 %v1800
        %v1817 = vunpack.c.l.b16 %v1801
        %v1818 = vunpack.c.l.b16 %v1802
        %v1819 = vunpack.c.l.b16 %v1803
        %v1820 = vunpack.c.l.b16 %v1804
        %v1821 = vunpack.c.l.b16 %v1805
        %v1822 = vunpack.c.l.b16 %v1806
        %v1823 = vpack.c.b16 %v1816, %v1815
        %v1824 = vpack.c.b16 %v1818, %v1817
        %v1825 = vpack.c.b16 %v1820, %v1819
        %v1826 = vpack.c.b16 %v1822, %v1821
        %v1832 = vsel %vm680, %v1797, 0
        %v1835 = vsel %vm680, %v1798, 0
        %1837 = vmatprep.subr.bf16.mxu0 0
        %1838 = vmatpush1.bf16.msra.mxu0 %v1823
        %1839 = vmatprep.subr.bf16.mxu0 0
        %1840 = vmatpush1.bf16.msra.mxu0 %v1824
        %1841 = vmatprep.subr.bf16.mxu0 0
        %1842 = vmatpush1.bf16.msra.mxu0 %v1825
        %1843 = vmatprep.subr.bf16.mxu0 0
        %1844 = vmatpush1.bf16.msra.mxu0 %v1826
        %1845 = vmatprep.subr.bf16.mxu0 0
        %1846 = vmatpush1.bf16.msra.mxu0 0
        %1847 = vmatprep.subr.bf16.mxu0 0
        %1848 = vmatpush1.bf16.msra.mxu0 0
        %1849 = vmatprep.subr.bf16.mxu0 0
        %1850 = vmatpush1.bf16.msra.mxu0 0
        %1851 = vmatprep.subr.bf16.mxu0 0
        %1852 = vmatpush1.bf16.msra.mxu0 0
        %1853 = vmatprep.subr.bf16.mxu0 0
        %1854 = vmatpush1.bf16.msra.mxu0 0
        %1855 = vmatprep.subr.bf16.mxu0 0
        %1856 = vmatpush1.bf16.msra.mxu0 0
        %1857 = vmatprep.subr.bf16.mxu0 0
        %1858 = vmatpush1.bf16.msra.mxu0 0
        %1859 = vmatprep.subr.bf16.mxu0 0
        %1860 = vmatpush1.bf16.msra.mxu0 0
        %1861 = vmatprep.subr.bf16.mxu0 0
        %1862 = vmatpush1.bf16.msra.mxu0 0
        %1863 = vmatprep.subr.bf16.mxu0 0
        %1864 = vmatpush1.bf16.msra.mxu0 0
        %1865 = vmatprep.subr.bf16.mxu0 0
        %1866 = vmatpush1.bf16.msra.mxu0 0
        %1867 = vmatprep.subr.bf16.mxu0 0
        %1868 = vmatpush1.bf16.msra.mxu0 0
        %1869 = vmatprep.mubr.bf16.mxu0 0
        %1870 = vmatmul.mubr.bf16.gmra.mrb[0].mxu0 %v1832
        %v1871 = vpop.f32.mrb[0].mxu0
        %v1872 = vadd.f32 0.0, %v1871
        %v1873 = vpop.f32.mrb[0].mxu0
        %v1874 = vpop.f32.mrb[0].mxu0
        %v1875 = vadd.f32 0.0, %v1874
        %v1876 = vpop.f32.mrb[0].mxu0
        %1877 = vmatprep.mubr.bf16.mxu0 0
        %1878 = vmatmul.mubr.bf16.gmra.mrb[0].mxu0 %v1835
        %v1879 = vpop.f32.mrb[0].mxu0
        %v1880 = vadd.f32 0.0, %v1879
        %v1881 = vpop.f32.mrb[0].mxu0
        %v1882 = vpop.f32.mrb[0].mxu0
        %v1883 = vadd.f32 0.0, %v1882
        %v1884 = vpop.f32.mrb[0].mxu0
        %1885 = vdwg.mxu0
        %v1886 = vld [vmem:[%s484] sm:$0xff]
        %v1887 = vld [vmem:[%s484 + $0x8] sm:$0xff]
        %v1888 = vld [vmem:[%s484 + $0x10] sm:$0xff]
        %v1889 = vld [vmem:[%s484 + $0x18] sm:$0xff]
        %v1890 = vadd.f32 %v1886, %v1872
        %v1891 = vadd.f32 %v1887, %v1875
        %v1892 = vadd.f32 %v1888, %v1880
        %v1893 = vadd.f32 %v1889, %v1883
        %1894 = vst.msk [vmem:[%s530] sm:$0xff] %vm551, %v1890
        %1895 = vst.msk [vmem:[%s530 + $0x8] sm:$0xff] %vm551, %v1891
        %1896 = vst.msk [vmem:[%s530 + $0x10] sm:$0xff] %vm551, %v1892
        %1897 = vst.msk [vmem:[%s530 + $0x18] sm:$0xff] %vm551, %v1893
        %s1898 = sand.u32 %s376, 1
        %s1899 = scalar_lea.sflag [#allocation12], %s1898
        %s1900 = sand.u32 %s376, 1
        %s1901 = smul.addr %s1900, 32
        %s1902 = scalar_lea.vmem [#allocation13], %s1901
        // Predicated region
        $region96: #{tpu_custom_call.1} parent=79 // pred_check
          %p1903 = pneg %p386
        $region97: #{tpu_custom_call.1} parent=79 // pred_check_branch
          %1905 = sbr.rel (%p1903) target = $region99
        $region98: #{tpu_custom_call.1} parent=79 // pred_region
          %s1906 = smul.u32 4, %s37
          %s1908 = ssub.s32 512, 512
          %1909 = vsyncadd %s1899, %s1908
          %s1910 = smul.addr %s36, 4
          %s1911 = sadd.s32 %s1906, %s1910
          %s1912 = smul.addr %s1911, 128
          %s1913 = scalar_lea.hbm %s15, %s1912
          %s1914 = sshll.u32 %s1902, 4
          %s1915 = int_to_ptr.vmem [resolvable:$true] %s1914
          %1920 = dma.vmem_to_hbm [thread:$0]  %s1915, 512, %s1913, %s1899, 128, 128, 8
        $region99: #{tpu_custom_call.1} parent=79 // pred_fallthru
          _
      $region80: #{tpu_custom_call.1} parent=5 // pred_fallthru
        _
      %p1921 = scmp.le.s32.totalorder 2, %s27
      // Predicated region
      $region100: #{tpu_custom_call.1} parent=5 // pred_check
        %p1922 = pneg %p1921
      $region101: #{tpu_custom_call.1} parent=5 // pred_check_branch
        %1924 = sbr.rel (%p1922) target = $region103
      $region102: #{tpu_custom_call.1} parent=5 // pred_region
        %s1925 = ssub.s32 %s27, 2
        // Predicated region
        $region104: #{tpu_custom_call.1} parent=102 // pred_check
          %p1926 = pneg %p392
        $region105: #{tpu_custom_call.1} parent=102 // pred_check_branch
          %1928 = sbr.rel (%p1926) target = $region107
        $region106: #{tpu_custom_call.1} parent=102 // pred_region
          %s1929 = sand.u32 %s377, 1
          %s1930 = scalar_lea.sflag [#allocation12], %s1929
          %s1931 = sand.u32 %s377, 1
          %s1932 = smul.addr %s1931, 32
          %s1933 = scalar_lea.vmem [#allocation13], %s1932
          %1934 = dma.done %s1930, 512
        $region107: #{tpu_custom_call.1} parent=102 // pred_fallthru
          _
      $region103: #{tpu_custom_call.1} parent=5 // pred_fallthru
        _
    $region6: #{tpu_custom_call.1} parent=1 // loop_footer
      %s31 = sadd.s32 1, %s27
    $region7: #{tpu_custom_call.1} parent=1 // loop_footer_branch
      %26 = sbr.rel target = $region3
    $region8: #{tpu_custom_call.1} parent=1 // loop_exit
      _
    %1935 = vsyncpa [#allocation11], 1
    %s1936 = scalar_lea.sflag [#allocation11], 1
    %1937 = vsyncpa %s1936, 1
    %1938 = vsyncpa [#allocation12], 1
    %s1939 = scalar_lea.sflag [#allocation12], 1
    %1940 = vsyncpa %s1939, 1

</llo_original>
